<compile_context>
chip_gen: v6e
topology: v6e:2x2x1
jax: 0.10.0
libtpu: 0.0.40
codegen_flags: <defaults>
</compile_context>

<pallas_src>
import jax
import jax.numpy as jnp
from jax import lax
from jax.experimental import pallas as pl
from jax.experimental.pallas import tpu as pltpu


# -----------------------------------------------------------------------------
# Fused kernel: conv+GAP backbone | text encoder | (BN-folded) classifier
# -----------------------------------------------------------------------------
def fused_kernel(p_ref, wconv_ref, bconv_ref, emb_ref, mask_ref,
                 wpool_ref, bpool_ref, wfci_ref, wfct_ref, bfc_ref, o_ref):
    B = o_ref.shape[0]
    HW = p_ref.shape[0] // B
    L = emb_ref.shape[0] // B

    # ---- image branch: one matmul over all B*HW patch rows, bias + ReLU,
    #      then per-batch global average pool (static-slice sublane reductions).
    acc = jnp.dot(p_ref[...], wconv_ref[...],
                  preferred_element_type=jnp.float32)                 # (B*HW, Cout)
    acc = jnp.maximum(acc + bconv_ref[...], 0.0)
    img_rows = [jnp.mean(acc[b * HW:(b + 1) * HW, :], axis=0, keepdims=True)
                for b in range(B)]
    img_feat = jnp.concatenate(img_rows, axis=0)                      # (B, Cout)

    # ---- text branch: batched masked mean pool (VPU) + one pooler matmul + tanh.
    m = mask_ref[...]                                                 # (B*L, 1)
    masked = emb_ref[...] * m                                         # (B*L, E)
    pooled_rows = []
    for b in range(B):
        s_b = jnp.sum(masked[b * L:(b + 1) * L, :], axis=0, keepdims=True)       # (1, E)
        d_b = jnp.sum(m[b * L:(b + 1) * L, :], axis=0, keepdims=True) + 1e-6     # (1, 1)
        pooled_rows.append(s_b * pl.reciprocal(d_b, approx=True))
    pooled = jnp.concatenate(pooled_rows, axis=0)                     # (B, E)
    txt_feat = jnp.tanh(
        jnp.dot(pooled, wpool_ref[...], preferred_element_type=jnp.float32)
        + bpool_ref[...])                                             # (B, 768)

    # ---- classifier: BN folded into (wfc, bfc); w_fc split at out_size so no
    #      feature concatenation is needed. Output is 128-lane padded.
    logits = (jnp.dot(img_feat, wfci_ref[...], preferred_element_type=jnp.float32)
              + jnp.dot(txt_feat, wfct_ref[...], preferred_element_type=jnp.float32)
              + bfc_ref[...])                                         # (B, Cp)
    o_ref[...] = 1.0 / (1.0 + jnp.exp(-logits))                       # sigmoid


def fused_forward_call(patches, w_conv, b_conv, emb_flat, mask_flat,
                       w_pool, b_pool, w_fc_img, w_fc_txt, b_fc, B):
    Cp = b_fc.shape[1]
    vmem = lambda: pl.BlockSpec(memory_space=pltpu.MemorySpace.VMEM)
    return pl.pallas_call(
        fused_kernel,
        out_shape=jax.ShapeDtypeStruct((B, Cp), jnp.float32),
        in_specs=[vmem() for _ in range(10)],
        out_specs=vmem(),
    )(patches, w_conv, b_conv, emb_flat, mask_flat,
      w_pool, b_pool, w_fc_img, w_fc_txt, b_fc)


# -----------------------------------------------------------------------------
# One-time parameter preparation (inference constants)
# -----------------------------------------------------------------------------
def prepare_params(params, out_size, lane=128):
    """Fold eval-mode BatchNorm1d into the FC layer, split w_fc at `out_size`
    (image vs text rows), and pad the class dim to a lane-dense width."""
    eps = 1e-5
    scale = params["bn_gamma"] * lax.rsqrt(params["bn_var"] + eps)    # (1, D)
    shift = params["bn_beta"] - params["bn_mean"] * scale             # (1, D)
    w_fold = scale.reshape(-1, 1) * params["w_fc"]                    # (D, C)
    b_fold = params["b_fc"] + shift @ params["w_fc"]                  # (1, C)
    C = w_fold.shape[1]
    Cp = ((C + lane - 1) // lane) * lane
    w_fold = jnp.pad(w_fold, ((0, 0), (0, Cp - C)))
    b_fold = jnp.pad(b_fold, ((0, 0), (0, Cp - C)))
    return {
        "w_conv": params["w_conv"], "b_conv": params["b_conv"],
        "emb_table": params["emb_table"],
        "w_pool": params["w_pool"], "b_pool": params["b_pool"],
        "w_fc_img": w_fold[:out_size], "w_fc_txt": w_fold[out_size:],
        "b_fc": b_fold,
    }


# -----------------------------------------------------------------------------
# Full forward (glue + fused kernel)
# -----------------------------------------------------------------------------
def multilabel_cnn_forward(prepared, x, txt_id, txt_mask, *, num_classes):
    B, Cin, H, W = x.shape
    HW = H * W
    L = txt_id.shape[1]

    # im2col glue: 3x3, pad=1, stride=1 -> (B*HW, Cin*9).
    # TODO(synk): build patches in-kernel (shifted slices of an (H+2,W+2) tile)
    # once H,W,Cin are non-toy, to avoid the 9x HBM blow-up + transpose here.
    xp = jnp.pad(x, ((0, 0), (0, 0), (1, 1), (1, 1)))
    patches = jnp.stack(
        [xp[:, :, i:i + H, j:j + W] for i in range(3) for j in range(3)], axis=2
    )                                                                  # (B, Cin, 9, H, W)
    patches = patches.reshape(B, Cin * 9, HW).transpose(0, 2, 1).reshape(B * HW, Cin * 9)

    # dropout: eval-mode identity
    emb_flat = prepared["emb_table"][txt_id].reshape(B * L, -1)        # (B*L, E) gather (glue)
    mask_flat = txt_mask.astype(jnp.float32).reshape(B * L, 1)

    out_padded = fused_forward_call(
        patches, prepared["w_conv"], prepared["b_conv"],
        emb_flat, mask_flat, prepared["w_pool"], prepared["b_pool"],
        prepared["w_fc_img"], prepared["w_fc_txt"], prepared["b_fc"], B)
    return out_padded[:, :num_classes]


def reference_forward(params, x, txt_id, txt_mask):
    """Pure jnp reference with the original (unfused, unfolded) math."""
    B, Cin, H, W = x.shape
    HW = H * W
    xp = jnp.pad(x, ((0, 0), (0, 0), (1, 1), (1, 1)))
    patches = jnp.stack(
        [xp[:, :, i:i + H, j:j + W] for i in range(3) for j in range(3)], axis=2
    ).reshape(B, Cin * 9, HW).transpose(0, 2, 1)
    conv = jnp.maximum(jnp.einsum("bpk,kc->bpc", patches, params["w_conv"])
                       + params["b_conv"], 0.0)
    img_feat = jnp.mean(conv, axis=1)

    emb = params["emb_table"][txt_id]
    m = txt_mask.astype(jnp.float32)
    pooled = (emb * m[:, :, None]).sum(axis=1) / (m.sum(axis=1, keepdims=True) + 1e-6)
    txt_feat = jnp.tanh(pooled @ params["w_pool"] + params["b_pool"])

    all_feat = jnp.concatenate([img_feat, txt_feat], axis=1)
    xn = (all_feat - params["bn_mean"]) * lax.rsqrt(params["bn_var"] + 1e-5)
    xn = xn * params["bn_gamma"] + params["bn_beta"]
    return jax.nn.sigmoid(xn @ params["w_fc"] + params["b_fc"])


# -----------------------------------------------------------------------------
if __name__ == "__main__":
    # Small shapes consistent with the module
    B, Cin, H, W = 2, 4, 16, 16          # image input (NCHW)
    out_size = 64                        # pretrained-backbone feature size
    txt_dim = 768                        # BERT pooled-output size (hard-coded in module)
    num_classes = 8
    L, E, vocab = 8, 32, 100             # text seq len / embedding dim / vocab

    key = jax.random.PRNGKey(0)
    ks = jax.random.split(key, 12)

    x = jax.random.normal(ks[0], (B, Cin, H, W), jnp.float32)
    txt_id = jax.random.randint(ks[1], (B, L), 0, vocab, jnp.int32)
    txt_mask = jnp.concatenate(
        [jnp.ones((B, L - 2), jnp.float32), jnp.zeros((B, 2), jnp.float32)], axis=1)

    params = {
        # synthetic backbone: 3x3 conv (Cin*9 -> out_size)
        "w_conv": jax.random.normal(ks[2], (Cin * 9, out_size), jnp.float32) * 0.1,
        "b_conv": jax.random.normal(ks[3], (1, out_size), jnp.float32) * 0.1,
        # synthetic text encoder
        "emb_table": jax.random.normal(ks[4], (vocab, E), jnp.float32) * 0.1,
        "w_pool": jax.random.normal(ks[5], (E, txt_dim), jnp.float32) * 0.1,
        "b_pool": jax.random.normal(ks[6], (1, txt_dim), jnp.float32) * 0.1,
        # classifier: BatchNorm1d(out_size+768) + Linear + Sigmoid
        "bn_gamma": jax.random.normal(ks[7], (1, out_size + txt_dim), jnp.float32) * 0.1 + 1.0,
        "bn_beta": jax.random.normal(ks[8], (1, out_size + txt_dim), jnp.float32) * 0.1,
        "bn_mean": jax.random.normal(ks[9], (1, out_size + txt_dim), jnp.float32) * 0.1,
        "bn_var": jax.random.uniform(ks[10], (1, out_size + txt_dim), jnp.float32, 0.5, 1.5),
        "w_fc": jax.random.normal(ks[11], (out_size + txt_dim, num_classes), jnp.float32) * 0.05,
        "b_fc": jnp.zeros((1, num_classes), jnp.float32),
    }

    # One-time constant transform (BN folding + w_fc split + lane padding).
    prepared = prepare_params(params, out_size)

    fwd = jax.jit(multilabel_cnn_forward, static_argnames=("num_classes",))
    out = fwd(prepared, x, txt_id, txt_mask, num_classes=num_classes)
    out = jax.block_until_ready(out)

    ref = jax.block_until_ready(reference_forward(params, x, txt_id, txt_mask))
    assert out.shape == (B, num_classes)
    # Tolerance relaxed slightly (vs 1e-5) because of pl.reciprocal(approx=True)
    # in the masked-mean denominator; observed error is far below this bound.
    assert jnp.allclose(out, ref, atol=1e-3, rtol=1e-3), "mismatch vs reference"

    print("KERNEL_OK")
</pallas_src>

<mosaic_0001>
module attributes {stable_mosaic.version = 11 : i64} {
  func.func @fused_kernel(%arg0: memref<512x36xf32, #tpu.memory_space<vmem>>, %arg1: memref<36x64xf32, #tpu.memory_space<vmem>>, %arg2: memref<1x64xf32, #tpu.memory_space<vmem>>, %arg3: memref<16x32xf32, #tpu.memory_space<vmem>>, %arg4: memref<16x1xf32, #tpu.memory_space<vmem>>, %arg5: memref<32x768xf32, #tpu.memory_space<vmem>>, %arg6: memref<1x768xf32, #tpu.memory_space<vmem>>, %arg7: memref<64x128xf32, #tpu.memory_space<vmem>>, %arg8: memref<768x128xf32, #tpu.memory_space<vmem>>, %arg9: memref<1x128xf32, #tpu.memory_space<vmem>>, %arg10: memref<2x128xf32, #tpu.memory_space<vmem>>) attributes {dimension_semantics = [], scalar_prefetch = 0 : i64, scratch_operands = 0 : i64, tpu.core_type = #tpu.core_type<tc>} {
    %c0 = arith.constant 0 : index
    %c0_0 = arith.constant 0 : index
    %0 = vector.load %arg0[%c0, %c0_0] : memref<512x36xf32, #tpu.memory_space<vmem>>, vector<512x36xf32>
    %c0_1 = arith.constant 0 : index
    %c0_2 = arith.constant 0 : index
    %1 = vector.load %arg1[%c0_1, %c0_2] : memref<36x64xf32, #tpu.memory_space<vmem>>, vector<36x64xf32>
    %cst = arith.constant dense<0.000000e+00> : vector<512x64xf32>
    %2 = tpu.matmul %0, %1, %cst {dimension_numbers = #tpu.dot_dimension_numbers<[1], [0], [0], [1], [0, 0, 1, 1], [], []>} : vector<512x36xf32>, vector<36x64xf32>, vector<512x64xf32> -> vector<512x64xf32>
    %c0_3 = arith.constant 0 : index
    %c0_4 = arith.constant 0 : index
    %3 = vector.load %arg2[%c0_3, %c0_4] : memref<1x64xf32, #tpu.memory_space<vmem>>, vector<1x64xf32>
    %4 = vector.broadcast %3 : vector<1x64xf32> to vector<512x64xf32>
    %5 = arith.addf %2, %4 : vector<512x64xf32>
    %cst_5 = arith.constant 0.000000e+00 : f32
    %6 = vector.broadcast %cst_5 : f32 to vector<512x64xf32>
    %7 = arith.maximumf %5, %6 : vector<512x64xf32>
    %8 = vector.extract_strided_slice %7 {offsets = [0, 0], sizes = [256, 64], strides = [1, 1]} : vector<512x64xf32> to vector<256x64xf32>
    %cst_6 = arith.constant dense<0.000000e+00> : vector<64xf32>
    %9 = vector.multi_reduction <add>, %8, %cst_6 [0] : vector<256x64xf32> to vector<64xf32>
    %10 = vector.shape_cast %9 : vector<64xf32> to vector<1x64xf32>
    %cst_7 = arith.constant 2.560000e+02 : f32
    %11 = vector.broadcast %cst_7 : f32 to vector<1x64xf32>
    %12 = arith.divf %10, %11 : vector<1x64xf32>
    %13 = vector.extract_strided_slice %7 {offsets = [256, 0], sizes = [256, 64], strides = [1, 1]} : vector<512x64xf32> to vector<256x64xf32>
    %cst_8 = arith.constant dense<0.000000e+00> : vector<64xf32>
    %14 = vector.multi_reduction <add>, %13, %cst_8 [0] : vector<256x64xf32> to vector<64xf32>
    %15 = vector.shape_cast %14 : vector<64xf32> to vector<1x64xf32>
    %cst_9 = arith.constant 2.560000e+02 : f32
    %16 = vector.broadcast %cst_9 : f32 to vector<1x64xf32>
    %17 = arith.divf %15, %16 : vector<1x64xf32>
    %18 = tpu.concatenate %12, %17 in 0 : vector<1x64xf32>, vector<1x64xf32> -> vector<2x64xf32>
    %c0_10 = arith.constant 0 : index
    %c0_11 = arith.constant 0 : index
    %19 = vector.load %arg4[%c0_10, %c0_11] : memref<16x1xf32, #tpu.memory_space<vmem>>, vector<16x1xf32>
    %c0_12 = arith.constant 0 : index
    %c0_13 = arith.constant 0 : index
    %20 = vector.load %arg3[%c0_12, %c0_13] : memref<16x32xf32, #tpu.memory_space<vmem>>, vector<16x32xf32>
    %21 = vector.broadcast %19 : vector<16x1xf32> to vector<16x32xf32>
    %22 = arith.mulf %20, %21 : vector<16x32xf32>
    %23 = vector.extract_strided_slice %22 {offsets = [0, 0], sizes = [8, 32], strides = [1, 1]} : vector<16x32xf32> to vector<8x32xf32>
    %cst_14 = arith.constant dense<0.000000e+00> : vector<32xf32>
    %24 = vector.multi_reduction <add>, %23, %cst_14 [0] : vector<8x32xf32> to vector<32xf32>
    %25 = vector.shape_cast %24 : vector<32xf32> to vector<1x32xf32>
    %26 = vector.extract_strided_slice %19 {offsets = [0, 0], sizes = [8, 1], strides = [1, 1]} : vector<16x1xf32> to vector<8x1xf32>
    %cst_15 = arith.constant dense<0.000000e+00> : vector<1xf32>
    %27 = vector.multi_reduction <add>, %26, %cst_15 [0] : vector<8x1xf32> to vector<1xf32>
    %28 = vector.shape_cast %27 : vector<1xf32> to vector<1x1xf32>
    %cst_16 = arith.constant 9.99999997E-7 : f32
    %29 = vector.broadcast %cst_16 : f32 to vector<1x1xf32>
    %30 = arith.addf %28, %29 : vector<1x1xf32>
    %31 = tpu.reciprocal %30 {approx = true} : vector<1x1xf32> -> vector<1x1xf32>
    %32 = vector.broadcast %31 : vector<1x1xf32> to vector<1x32xf32>
    %33 = arith.mulf %25, %32 : vector<1x32xf32>
    %34 = vector.extract_strided_slice %22 {offsets = [8, 0], sizes = [8, 32], strides = [1, 1]} : vector<16x32xf32> to vector<8x32xf32>
    %cst_17 = arith.constant dense<0.000000e+00> : vector<32xf32>
    %35 = vector.multi_reduction <add>, %34, %cst_17 [0] : vector<8x32xf32> to vector<32xf32>
    %36 = vector.shape_cast %35 : vector<32xf32> to vector<1x32xf32>
    %37 = vector.extract_strided_slice %19 {offsets = [8, 0], sizes = [8, 1], strides = [1, 1]} : vector<16x1xf32> to vector<8x1xf32>
    %cst_18 = arith.constant dense<0.000000e+00> : vector<1xf32>
    %38 = vector.multi_reduction <add>, %37, %cst_18 [0] : vector<8x1xf32> to vector<1xf32>
    %39 = vector.shape_cast %38 : vector<1xf32> to vector<1x1xf32>
    %cst_19 = arith.constant 9.99999997E-7 : f32
    %40 = vector.broadcast %cst_19 : f32 to vector<1x1xf32>
    %41 = arith.addf %39, %40 : vector<1x1xf32>
    %42 = tpu.reciprocal %41 {approx = true} : vector<1x1xf32> -> vector<1x1xf32>
    %43 = vector.broadcast %42 : vector<1x1xf32> to vector<1x32xf32>
    %44 = arith.mulf %36, %43 : vector<1x32xf32>
    %45 = tpu.concatenate %33, %44 in 0 : vector<1x32xf32>, vector<1x32xf32> -> vector<2x32xf32>
    %c0_20 = arith.constant 0 : index
    %c0_21 = arith.constant 0 : index
    %46 = vector.load %arg5[%c0_20, %c0_21] : memref<32x768xf32, #tpu.memory_space<vmem>>, vector<32x768xf32>
    %cst_22 = arith.constant dense<0.000000e+00> : vector<2x768xf32>
    %47 = tpu.matmul %45, %46, %cst_22 {dimension_numbers = #tpu.dot_dimension_numbers<[1], [0], [0], [1], [0, 0, 1, 1], [], []>} : vector<2x32xf32>, vector<32x768xf32>, vector<2x768xf32> -> vector<2x768xf32>
    %c0_23 = arith.constant 0 : index
    %c0_24 = arith.constant 0 : index
    %48 = vector.load %arg6[%c0_23, %c0_24] : memref<1x768xf32, #tpu.memory_space<vmem>>, vector<1x768xf32>
    %49 = vector.broadcast %48 : vector<1x768xf32> to vector<2x768xf32>
    %50 = arith.addf %47, %49 : vector<2x768xf32>
    %51 = math.tanh %50 : vector<2x768xf32>
    %c0_25 = arith.constant 0 : index
    %c0_26 = arith.constant 0 : index
    %52 = vector.load %arg7[%c0_25, %c0_26] : memref<64x128xf32, #tpu.memory_space<vmem>>, vector<64x128xf32>
    %cst_27 = arith.constant dense<0.000000e+00> : vector<2x128xf32>
    %53 = tpu.matmul %18, %52, %cst_27 {dimension_numbers = #tpu.dot_dimension_numbers<[1], [0], [0], [1], [0, 0, 1, 1], [], []>} : vector<2x64xf32>, vector<64x128xf32>, vector<2x128xf32> -> vector<2x128xf32>
    %c0_28 = arith.constant 0 : index
    %c0_29 = arith.constant 0 : index
    %54 = vector.load %arg8[%c0_28, %c0_29] : memref<768x128xf32, #tpu.memory_space<vmem>>, vector<768x128xf32>
    %cst_30 = arith.constant dense<0.000000e+00> : vector<2x128xf32>
    %55 = tpu.matmul %51, %54, %cst_30 {dimension_numbers = #tpu.dot_dimension_numbers<[1], [0], [0], [1], [0, 0, 1, 1], [], []>} : vector<2x768xf32>, vector<768x128xf32>, vector<2x128xf32> -> vector<2x128xf32>
    %56 = arith.addf %53, %55 : vector<2x128xf32>
    %c0_31 = arith.constant 0 : index
    %c0_32 = arith.constant 0 : index
    %57 = vector.load %arg9[%c0_31, %c0_32] : memref<1x128xf32, #tpu.memory_space<vmem>>, vector<1x128xf32>
    %58 = vector.broadcast %57 : vector<1x128xf32> to vector<2x128xf32>
    %59 = arith.addf %56, %58 : vector<2x128xf32>
    %cst_33 = arith.constant 0.000000e+00 : f32
    %60 = vector.broadcast %cst_33 : f32 to vector<2x128xf32>
    %61 = arith.subf %60, %59 : vector<2x128xf32>
    %62 = math.exp %61 : vector<2x128xf32>
    %cst_34 = arith.constant 1.000000e+00 : f32
    %63 = vector.broadcast %cst_34 : f32 to vector<2x128xf32>
    %64 = arith.addf %63, %62 : vector<2x128xf32>
    %cst_35 = arith.constant 1.000000e+00 : f32
    %65 = vector.broadcast %cst_35 : f32 to vector<2x128xf32>
    %66 = arith.divf %65, %64 : vector<2x128xf32>
    %c0_36 = arith.constant 0 : index
    %c0_37 = arith.constant 0 : index
    %67 = vector.load %arg10[%c0_36, %c0_37] : memref<2x128xf32, #tpu.memory_space<vmem>>, vector<2x128xf32>
    tpu.vector_store %arg10[%c0_36, %c0_37], %66 {strides = array<i32>} : memref<2x128xf32, #tpu.memory_space<vmem>>, vector<2x128xf32>,
    return
  }
}

</mosaic_0001>

<llo_original>
// kernel: multilabel_cnn_forward.1
$region0: #{multilabel_cnn_forward.1}
  #allocation0 [shape = 'u32[]', space=smem, size = 0x4, offset = 0x4, fixed_abs, tag = 'smem constant byte address 0x4 - core index']
  #allocation1 [shape = 'u32[144,128]{1,0:T(1,128)}', space=vmem, size = 0x12000, scoped, tag = 'internal scratch']
  %s0 = inlined_call_operand.vmem [shape: f32[512,36], index: 0, kind: input, shape index: {}]
  %s1 = inlined_call_operand.vmem [shape: f32[36,64], index: 1, kind: input, shape index: {}]
  %s2 = inlined_call_operand.vmem [shape: f32[1,64], index: 2, kind: input, shape index: {}]
  %s3 = inlined_call_operand.vmem [shape: f32[16,32], index: 3, kind: input, shape index: {}]
  %s4 = inlined_call_operand.vmem [shape: f32[16,1], index: 4, kind: input, shape index: {}]
  %s5 = inlined_call_operand.vmem [shape: f32[32,768], index: 5, kind: input, shape index: {}]
  %s6 = inlined_call_operand.vmem [shape: f32[1,768], index: 6, kind: input, shape index: {}]
  %s7 = inlined_call_operand.vmem [shape: f32[64,128], index: 7, kind: input, shape index: {}]
  %s8 = inlined_call_operand.vmem [shape: f32[768,128], index: 8, kind: input, shape index: {}]
  %s9 = inlined_call_operand.vmem [shape: f32[1,128], index: 9, kind: input, shape index: {}]
  %s10 = inlined_call_operand.hbm [shape: f32[2,128], index: 10, kind: output, shape index: {}]
  %s11 = sld [smem:[#allocation0]]
  $region50: #{multilabel_cnn_forward.1} parent=0
    _
  %s13 = ssub.s32 1, %s11
  %s14 = scalar_select 0, %s13, %s11
  $region1: #{multilabel_cnn_forward.1} parent=0
    #allocation2 [shape = 'u8[1024]{0}', space=vmem, size = 0x400, scoped, tag = 'output window, operand 0, single buffered']
    #allocation3 [shape = 's32[1]{0}', space=sflag, size = 0x4, scoped, tag = 'scoped memory for multilabel_cnn_forward.1']
    %15 = vsyncpa [#allocation3], 0
    // Predicated region
    $region2: #{multilabel_cnn_forward.1} parent=1 // pred_check
      _
    $region3: #{multilabel_cnn_forward.1} parent=1 // pred_check_branch
      %17 = sbr.rel (0) target = $region5
    $region4: #{multilabel_cnn_forward.1} parent=1 // pred_region
      _
    $region5: #{multilabel_cnn_forward.1} parent=1 // pred_fallthru
      _
    // Predicated region
    $region6: #{multilabel_cnn_forward.1} parent=1 // pred_check
      _
    $region7: #{multilabel_cnn_forward.1} parent=1 // pred_check_branch
      %19 = sbr.rel (0) target = $region9
    $region8: #{multilabel_cnn_forward.1} parent=1 // pred_region
      _
    $region9: #{multilabel_cnn_forward.1} parent=1 // pred_fallthru
      _
    // Predicated region
    $region10: #{multilabel_cnn_forward.1} parent=1 // pred_check
      _
    $region11: #{multilabel_cnn_forward.1} parent=1 // pred_check_branch
      %21 = sbr.rel (0) target = $region13
    $region12: #{multilabel_cnn_forward.1} parent=1 // pred_region
      _
    $region13: #{multilabel_cnn_forward.1} parent=1 // pred_fallthru
      _
    // Predicated region
    $region14: #{multilabel_cnn_forward.1} parent=1 // pred_check
      _
    $region15: #{multilabel_cnn_forward.1} parent=1 // pred_check_branch
      %23 = sbr.rel (0) target = $region17
    $region16: #{multilabel_cnn_forward.1} parent=1 // pred_region
      _
    $region17: #{multilabel_cnn_forward.1} parent=1 // pred_fallthru
      _
    // Predicated region
    $region18: #{multilabel_cnn_forward.1} parent=1 // pred_check
      _
    $region19: #{multilabel_cnn_forward.1} parent=1 // pred_check_branch
      %25 = sbr.rel (0) target = $region21
    $region20: #{multilabel_cnn_forward.1} parent=1 // pred_region
      _
    $region21: #{multilabel_cnn_forward.1} parent=1 // pred_fallthru
      _
    // Predicated region
    $region22: #{multilabel_cnn_forward.1} parent=1 // pred_check
      _
    $region23: #{multilabel_cnn_forward.1} parent=1 // pred_check_branch
      %27 = sbr.rel (0) target = $region25
    $region24: #{multilabel_cnn_forward.1} parent=1 // pred_region
      _
    $region25: #{multilabel_cnn_forward.1} parent=1 // pred_fallthru
      _
    // Predicated region
    $region26: #{multilabel_cnn_forward.1} parent=1 // pred_check
      _
    $region27: #{multilabel_cnn_forward.1} parent=1 // pred_check_branch
      %29 = sbr.rel (0) target = $region29
    $region28: #{multilabel_cnn_forward.1} parent=1 // pred_region
      _
    $region29: #{multilabel_cnn_forward.1} parent=1 // pred_fallthru
      _
    // Predicated region
    $region30: #{multilabel_cnn_forward.1} parent=1 // pred_check
      _
    $region31: #{multilabel_cnn_forward.1} parent=1 // pred_check_branch
      %31 = sbr.rel (0) target = $region33
    $region32: #{multilabel_cnn_forward.1} parent=1 // pred_region
      _
    $region33: #{multilabel_cnn_forward.1} parent=1 // pred_fallthru
      _
    // Predicated region
    $region34: #{multilabel_cnn_forward.1} parent=1 // pred_check
      _
    $region35: #{multilabel_cnn_forward.1} parent=1 // pred_check_branch
      %33 = sbr.rel (0) target = $region37
    $region36: #{multilabel_cnn_forward.1} parent=1 // pred_region
      _
    $region37: #{multilabel_cnn_forward.1} parent=1 // pred_fallthru
      _
    // Predicated region
    $region38: #{multilabel_cnn_forward.1} parent=1 // pred_check
      _
    $region39: #{multilabel_cnn_forward.1} parent=1 // pred_check_branch
      %35 = sbr.rel (0) target = $region41
    $region40: #{multilabel_cnn_forward.1} parent=1 // pred_region
      _
    $region41: #{multilabel_cnn_forward.1} parent=1 // pred_fallthru
      _
    %v36 = vld [vmem:[%s0] sm:$0xff]
    %v37 = vld [vmem:[%s0 + $0x8] sm:$0xff]
    %v38 = vld [vmem:[%s0 + $0x10] sm:$0xff]
    %v39 = vld [vmem:[%s0 + $0x18] sm:$0xff]
    %v40 = vld [vmem:[%s0 + $0x20] sm:$0xff]
    %v41 = vld [vmem:[%s0 + $0x28] sm:$0xff]
    %v42 = vld [vmem:[%s0 + $0x30] sm:$0xff]
    %v43 = vld [vmem:[%s0 + $0x38] sm:$0xff]
    %v44 = vld [vmem:[%s0 + $0x40] sm:$0xff]
    %v45 = vld [vmem:[%s0 + $0x48] sm:$0xff]
    %v46 = vld [vmem:[%s0 + $0x50] sm:$0xff]
    %v47 = vld [vmem:[%s0 + $0x58] sm:$0xff]
    %v48 = vld [vmem:[%s0 + $0x60] sm:$0xff]
    %v49 = vld [vmem:[%s0 + $0x68] sm:$0xff]
    %v50 = vld [vmem:[%s0 + $0x70] sm:$0xff]
    %v51 = vld [vmem:[%s0 + $0x78] sm:$0xff]
    %v52 = vld [vmem:[%s0 + $0x80] sm:$0xff]
    %v53 = vld [vmem:[%s0 + $0x88] sm:$0xff]
    %v54 = vld [vmem:[%s0 + $0x90] sm:$0xff]
    %v55 = vld [vmem:[%s0 + $0x98] sm:$0xff]
    %v56 = vld [vmem:[%s0 + $0xa0] sm:$0xff]
    %v57 = vld [vmem:[%s0 + $0xa8] sm:$0xff]
    %v58 = vld [vmem:[%s0 + $0xb0] sm:$0xff]
    %v59 = vld [vmem:[%s0 + $0xb8] sm:$0xff]
    %v60 = vld [vmem:[%s0 + $0xc0] sm:$0xff]
    %v61 = vld [vmem:[%s0 + $0xc8] sm:$0xff]
    %v62 = vld [vmem:[%s0 + $0xd0] sm:$0xff]
    %v63 = vld [vmem:[%s0 + $0xd8] sm:$0xff]
    %v64 = vld [vmem:[%s0 + $0xe0] sm:$0xff]
    %v65 = vld [vmem:[%s0 + $0xe8] sm:$0xff]
    %v66 = vld [vmem:[%s0 + $0xf0] sm:$0xff]
    %v67 = vld [vmem:[%s0 + $0xf8] sm:$0xff]
    %v68 = vld [vmem:[%s0 + $0x100] sm:$0xff]
    %v69 = vld [vmem:[%s0 + $0x108] sm:$0xff]
    %v70 = vld [vmem:[%s0 + $0x110] sm:$0xff]
    %v71 = vld [vmem:[%s0 + $0x118] sm:$0xff]
    %v72 = vld [vmem:[%s0 + $0x120] sm:$0xff]
    %v73 = vld [vmem:[%s0 + $0x128] sm:$0xff]
    %v74 = vld [vmem:[%s0 + $0x130] sm:$0xff]
    %v75 = vld [vmem:[%s0 + $0x138] sm:$0xff]
    %v76 = vld [vmem:[%s0 + $0x140] sm:$0xff]
    %v77 = vld [vmem:[%s0 + $0x148] sm:$0xff]
    %v78 = vld [vmem:[%s0 + $0x150] sm:$0xff]
    %v79 = vld [vmem:[%s0 + $0x158] sm:$0xff]
    %v80 = vld [vmem:[%s0 + $0x160] sm:$0xff]
    %v81 = vld [vmem:[%s0 + $0x168] sm:$0xff]
    %v82 = vld [vmem:[%s0 + $0x170] sm:$0xff]
    %v83 = vld [vmem:[%s0 + $0x178] sm:$0xff]
    %v84 = vld [vmem:[%s0 + $0x180] sm:$0xff]
    %v85 = vld [vmem:[%s0 + $0x188] sm:$0xff]
    %v86 = vld [vmem:[%s0 + $0x190] sm:$0xff]
    %v87 = vld [vmem:[%s0 + $0x198] sm:$0xff]
    %v88 = vld [vmem:[%s0 + $0x1a0] sm:$0xff]
    %v89 = vld [vmem:[%s0 + $0x1a8] sm:$0xff]
    %v90 = vld [vmem:[%s0 + $0x1b0] sm:$0xff]
    %v91 = vld [vmem:[%s0 + $0x1b8] sm:$0xff]
    %v92 = vld [vmem:[%s0 + $0x1c0] sm:$0xff]
    %v93 = vld [vmem:[%s0 + $0x1c8] sm:$0xff]
    %v94 = vld [vmem:[%s0 + $0x1d0] sm:$0xff]
    %v95 = vld [vmem:[%s0 + $0x1d8] sm:$0xff]
    %v96 = vld [vmem:[%s0 + $0x1e0] sm:$0xff]
    %v97 = vld [vmem:[%s0 + $0x1e8] sm:$0xff]
    %v98 = vld [vmem:[%s0 + $0x1f0] sm:$0xff]
    %v99 = vld [vmem:[%s0 + $0x1f8] sm:$0xff]
    %v100 = vld [vmem:[%s1] sm:$0xff]
    %v101 = vld [vmem:[%s1 + $0x8] sm:$0xff]
    %v102 = vld [vmem:[%s1 + $0x10] sm:$0xff]
    %v103 = vld [vmem:[%s1 + $0x18] sm:$0xff]
    %v104 = vld [vmem:[%s1 + $0x20] sm:$0xf]
    %v105 = vld [vmem:[%s2] sm:$0x1]
    %v107 = vlaneseq
    %v108 = vshrl.u32 %v107, 7
    %v109 = vsub.s32 0, %v108
    %v110 = vrot.slane %v105, %v109
    %vm112 = vcmask 293888
    %v114 = vsel %vm112, %v36, 0
    %v117 = vsel %vm112, %v37, 0
    %v120 = vsel %vm112, %v38, 0
    %v123 = vsel %vm112, %v39, 0
    %v126 = vsel %vm112, %v40, 0
    %v129 = vsel %vm112, %v41, 0
    %v132 = vsel %vm112, %v42, 0
    %v135 = vsel %vm112, %v43, 0
    %v138 = vsel %vm112, %v44, 0
    %v141 = vsel %vm112, %v45, 0
    %v144 = vsel %vm112, %v46, 0
    %v147 = vsel %vm112, %v47, 0
    %v150 = vsel %vm112, %v48, 0
    %v153 = vsel %vm112, %v49, 0
    %v156 = vsel %vm112, %v50, 0
    %v159 = vsel %vm112, %v51, 0
    %v162 = vsel %vm112, %v52, 0
    %v165 = vsel %vm112, %v53, 0
    %v168 = vsel %vm112, %v54, 0
    %v171 = vsel %vm112, %v55, 0
    %v174 = vsel %vm112, %v56, 0
    %v177 = vsel %vm112, %v57, 0
    %v180 = vsel %vm112, %v58, 0
    %v183 = vsel %vm112, %v59, 0
    %v186 = vsel %vm112, %v60, 0
    %v189 = vsel %vm112, %v61, 0
    %v192 = vsel %vm112, %v62, 0
    %v195 = vsel %vm112, %v63, 0
    %v198 = vsel %vm112, %v64, 0
    %v201 = vsel %vm112, %v65, 0
    %v204 = vsel %vm112, %v66, 0
    %v207 = vsel %vm112, %v67, 0
    %v210 = vsel %vm112, %v68, 0
    %v213 = vsel %vm112, %v69, 0
    %v216 = vsel %vm112, %v70, 0
    %v219 = vsel %vm112, %v71, 0
    %v222 = vsel %vm112, %v72, 0
    %v225 = vsel %vm112, %v73, 0
    %v228 = vsel %vm112, %v74, 0
    %v231 = vsel %vm112, %v75, 0
    %v234 = vsel %vm112, %v76, 0
    %v237 = vsel %vm112, %v77, 0
    %v240 = vsel %vm112, %v78, 0
    %v243 = vsel %vm112, %v79, 0
    %v246 = vsel %vm112, %v80, 0
    %v249 = vsel %vm112, %v81, 0
    %v252 = vsel %vm112, %v82, 0
    %v255 = vsel %vm112, %v83, 0
    %v258 = vsel %vm112, %v84, 0
    %v261 = vsel %vm112, %v85, 0
    %v264 = vsel %vm112, %v86, 0
    %v267 = vsel %vm112, %v87, 0
    %v270 = vsel %vm112, %v88, 0
    %v273 = vsel %vm112, %v89, 0
    %v276 = vsel %vm112, %v90, 0
    %v279 = vsel %vm112, %v91, 0
    %v282 = vsel %vm112, %v92, 0
    %v285 = vsel %vm112, %v93, 0
    %v288 = vsel %vm112, %v94, 0
    %v291 = vsel %vm112, %v95, 0
    %v294 = vsel %vm112, %v96, 0
    %v297 = vsel %vm112, %v97, 0
    %v300 = vsel %vm112, %v98, 0
    %v303 = vsel %vm112, %v99, 0
    %vm305 = vcmask 1043456
    %v307 = vsel %vm305, %v104, 0
    %309 = vmatprep.subr.mxu0 0.0
    %310 = vmatpush1.msra.mxu0 0.0
    %311 = vmatprep.subr.mxu0 0.0
    %312 = vmatpush1.msra.mxu0 0.0
    %313 = vmatprep.subr.mxu0 0.0
    %314 = vmatpush1.msra.mxu0 0.0
    %315 = vmatprep.subr.mxu0 0.0
    %316 = vmatpush1.msra.mxu0 0.0
    %317 = vmatprep.subr.mxu0 0.0
    %318 = vmatpush1.msra.mxu0 0.0
    %319 = vmatprep.subr.mxu0 0.0
    %320 = vmatpush1.msra.mxu0 0.0
    %321 = vmatprep.subr.mxu0 0.0
    %322 = vmatpush1.msra.mxu0 0.0
    %323 = vmatprep.subr.mxu0 0.0
    %324 = vmatpush1.msra.mxu0 0.0
    %325 = vmatprep.subr.mxu0 0.0
    %326 = vmatpush1.msra.mxu0 0.0
    %327 = vmatprep.subr.mxu0 0.0
    %328 = vmatpush1.msra.mxu0 0.0
    %329 = vmatprep.subr.mxu0 0.0
    %330 = vmatpush1.msra.mxu0 0.0
    %331 = vmatprep.subr.mxu0 0.0
    %332 = vmatpush1.msra.mxu0 %v307
    %333 = vmatprep.subr.mxu0 0.0
    %334 = vmatpush1.msra.mxu0 %v103
    %335 = vmatprep.subr.mxu0 0.0
    %336 = vmatpush1.msra.mxu0 %v102
    %337 = vmatprep.subr.mxu0 0.0
    %338 = vmatpush1.msra.mxu0 %v101
    %339 = vmatprep.subr.mxu0 0.0
    %340 = vmatpush1.msra.mxu0 %v100
    %341 = vmatprep.subr.mxu0 0.0
    %342 = vmatpush2.msra.mxu0 0.0
    %343 = vmatprep.subr.mxu0 0.0
    %344 = vmatpush2.msra.mxu0 0.0
    %345 = vmatprep.subr.mxu0 0.0
    %346 = vmatpush2.msra.mxu0 0.0
    %347 = vmatprep.subr.mxu0 0.0
    %348 = vmatpush2.msra.mxu0 0.0
    %349 = vmatprep.subr.mxu0 0.0
    %350 = vmatpush2.msra.mxu0 0.0
    %351 = vmatprep.subr.mxu0 0.0
    %352 = vmatpush2.msra.mxu0 0.0
    %353 = vmatprep.subr.mxu0 0.0
    %354 = vmatpush2.msra.mxu0 0.0
    %355 = vmatprep.subr.mxu0 0.0
    %356 = vmatpush2.msra.mxu0 0.0
    %357 = vmatprep.subr.mxu0 0.0
    %358 = vmatpush2.msra.mxu0 0.0
    %359 = vmatprep.subr.mxu0 0.0
    %360 = vmatpush2.msra.mxu0 0.0
    %361 = vmatprep.subr.mxu0 0.0
    %362 = vmatpush2.msra.mxu0 0.0
    %363 = vmatprep.subr.mxu0 0.0
    %364 = vmatpush2.msra.mxu0 0.0
    %365 = vmatprep.subr.mxu0 0.0
    %366 = vmatpush2.msra.mxu0 0.0
    %367 = vmatprep.subr.mxu0 0.0
    %368 = vmatpush2.msra.mxu0 0.0
    %369 = vmatprep.subr.mxu0 0.0
    %370 = vmatpush2.msra.mxu0 0.0
    %371 = vmatprep.subr.mxu0 0.0
    %372 = vmatpush2.msra.mxu0 0.0
    %373 = vmatprep.mubr.f32.mxu0 0.0
    %374 = vmatmul.mubr.f32.gmra.mxu0 %v114
    %v375 = vpop.f32.mrf.mxu0
    %v376 = vadd.f32 %v110, %v375
    %v377 = vpop.f32.mrf.mxu0
    %378 = vmatprep.mubr.f32.mxu0 0.0
    %379 = vmatmul.mubr.f32.gmra.mxu0 %v117
    %v380 = vpop.f32.mrf.mxu0
    %v381 = vadd.f32 %v110, %v380
    %v382 = vpop.f32.mrf.mxu0
    %383 = vmatprep.mubr.f32.mxu0 0.0
    %384 = vmatmul.mubr.f32.gmra.mxu0 %v120
    %v385 = vpop.f32.mrf.mxu0
    %v386 = vadd.f32 %v110, %v385
    %v387 = vpop.f32.mrf.mxu0
    %388 = vmatprep.mubr.f32.mxu0 0.0
    %389 = vmatmul.mubr.f32.gmra.mxu0 %v123
    %v390 = vpop.f32.mrf.mxu0
    %v391 = vadd.f32 %v110, %v390
    %v392 = vpop.f32.mrf.mxu0
    %393 = vmatprep.mubr.f32.mxu0 0.0
    %394 = vmatmul.mubr.f32.gmra.mxu0 %v126
    %v395 = vpop.f32.mrf.mxu0
    %v396 = vadd.f32 %v110, %v395
    %v397 = vpop.f32.mrf.mxu0
    %398 = vmatprep.mubr.f32.mxu0 0.0
    %399 = vmatmul.mubr.f32.gmra.mxu0 %v129
    %v400 = vpop.f32.mrf.mxu0
    %v401 = vadd.f32 %v110, %v400
    %v402 = vpop.f32.mrf.mxu0
    %403 = vmatprep.mubr.f32.mxu0 0.0
    %404 = vmatmul.mubr.f32.gmra.mxu0 %v132
    %v405 = vpop.f32.mrf.mxu0
    %v406 = vadd.f32 %v110, %v405
    %v407 = vpop.f32.mrf.mxu0
    %408 = vmatprep.mubr.f32.mxu0 0.0
    %409 = vmatmul.mubr.f32.gmra.mxu0 %v135
    %v410 = vpop.f32.mrf.mxu0
    %v411 = vadd.f32 %v110, %v410
    %v412 = vpop.f32.mrf.mxu0
    %413 = vmatprep.mubr.f32.mxu0 0.0
    %414 = vmatmul.mubr.f32.gmra.mxu0 %v138
    %v415 = vpop.f32.mrf.mxu0
    %v416 = vadd.f32 %v110, %v415
    %v417 = vpop.f32.mrf.mxu0
    %418 = vmatprep.mubr.f32.mxu0 0.0
    %419 = vmatmul.mubr.f32.gmra.mxu0 %v141
    %v420 = vpop.f32.mrf.mxu0
    %v421 = vadd.f32 %v110, %v420
    %v422 = vpop.f32.mrf.mxu0
    %423 = vmatprep.mubr.f32.mxu0 0.0
    %424 = vmatmul.mubr.f32.gmra.mxu0 %v144
    %v425 = vpop.f32.mrf.mxu0
    %v426 = vadd.f32 %v110, %v425
    %v427 = vpop.f32.mrf.mxu0
    %428 = vmatprep.mubr.f32.mxu0 0.0
    %429 = vmatmul.mubr.f32.gmra.mxu0 %v147
    %v430 = vpop.f32.mrf.mxu0
    %v431 = vadd.f32 %v110, %v430
    %v432 = vpop.f32.mrf.mxu0
    %433 = vmatprep.mubr.f32.mxu0 0.0
    %434 = vmatmul.mubr.f32.gmra.mxu0 %v150
    %v435 = vpop.f32.mrf.mxu0
    %v436 = vadd.f32 %v110, %v435
    %v437 = vpop.f32.mrf.mxu0
    %438 = vmatprep.mubr.f32.mxu0 0.0
    %439 = vmatmul.mubr.f32.gmra.mxu0 %v153
    %v440 = vpop.f32.mrf.mxu0
    %v441 = vadd.f32 %v110, %v440
    %v442 = vpop.f32.mrf.mxu0
    %443 = vmatprep.mubr.f32.mxu0 0.0
    %444 = vmatmul.mubr.f32.gmra.mxu0 %v156
    %v445 = vpop.f32.mrf.mxu0
    %v446 = vadd.f32 %v110, %v445
    %v447 = vpop.f32.mrf.mxu0
    %448 = vmatprep.mubr.f32.mxu0 0.0
    %449 = vmatmul.mubr.f32.gmra.mxu0 %v159
    %v450 = vpop.f32.mrf.mxu0
    %v451 = vadd.f32 %v110, %v450
    %v452 = vpop.f32.mrf.mxu0
    %453 = vmatprep.mubr.f32.mxu0 0.0
    %454 = vmatmul.mubr.f32.gmra.mxu0 %v162
    %v455 = vpop.f32.mrf.mxu0
    %v456 = vadd.f32 %v110, %v455
    %v457 = vpop.f32.mrf.mxu0
    %458 = vmatprep.mubr.f32.mxu0 0.0
    %459 = vmatmul.mubr.f32.gmra.mxu0 %v165
    %v460 = vpop.f32.mrf.mxu0
    %v461 = vadd.f32 %v110, %v460
    %v462 = vpop.f32.mrf.mxu0
    %463 = vmatprep.mubr.f32.mxu0 0.0
    %464 = vmatmul.mubr.f32.gmra.mxu0 %v168
    %v465 = vpop.f32.mrf.mxu0
    %v466 = vadd.f32 %v110, %v465
    %v467 = vpop.f32.mrf.mxu0
    %468 = vmatprep.mubr.f32.mxu0 0.0
    %469 = vmatmul.mubr.f32.gmra.mxu0 %v171
    %v470 = vpop.f32.mrf.mxu0
    %v471 = vadd.f32 %v110, %v470
    %v472 = vpop.f32.mrf.mxu0
    %473 = vmatprep.mubr.f32.mxu0 0.0
    %474 = vmatmul.mubr.f32.gmra.mxu0 %v174
    %v475 = vpop.f32.mrf.mxu0
    %v476 = vadd.f32 %v110, %v475
    %v477 = vpop.f32.mrf.mxu0
    %478 = vmatprep.mubr.f32.mxu0 0.0
    %479 = vmatmul.mubr.f32.gmra.mxu0 %v177
    %v480 = vpop.f32.mrf.mxu0
    %v481 = vadd.f32 %v110, %v480
    %v482 = vpop.f32.mrf.mxu0
    %483 = vmatprep.mubr.f32.mxu0 0.0
    %484 = vmatmul.mubr.f32.gmra.mxu0 %v180
    %v485 = vpop.f32.mrf.mxu0
    %v486 = vadd.f32 %v110, %v485
    %v487 = vpop.f32.mrf.mxu0
    %488 = vmatprep.mubr.f32.mxu0 0.0
    %489 = vmatmul.mubr.f32.gmra.mxu0 %v183
    %v490 = vpop.f32.mrf.mxu0
    %v491 = vadd.f32 %v110, %v490
    %v492 = vpop.f32.mrf.mxu0
    %493 = vmatprep.mubr.f32.mxu0 0.0
    %494 = vmatmul.mubr.f32.gmra.mxu0 %v186
    %v495 = vpop.f32.mrf.mxu0
    %v496 = vadd.f32 %v110, %v495
    %v497 = vpop.f32.mrf.mxu0
    %498 = vmatprep.mubr.f32.mxu0 0.0
    %499 = vmatmul.mubr.f32.gmra.mxu0 %v189
    %v500 = vpop.f32.mrf.mxu0
    %v501 = vadd.f32 %v110, %v500
    %v502 = vpop.f32.mrf.mxu0
    %503 = vmatprep.mubr.f32.mxu0 0.0
    %504 = vmatmul.mubr.f32.gmra.mxu0 %v192
    %v505 = vpop.f32.mrf.mxu0
    %v506 = vadd.f32 %v110, %v505
    %v507 = vpop.f32.mrf.mxu0
    %508 = vmatprep.mubr.f32.mxu0 0.0
    %509 = vmatmul.mubr.f32.gmra.mxu0 %v195
    %v510 = vpop.f32.mrf.mxu0
    %v511 = vadd.f32 %v110, %v510
    %v512 = vpop.f32.mrf.mxu0
    %513 = vmatprep.mubr.f32.mxu0 0.0
    %514 = vmatmul.mubr.f32.gmra.mxu0 %v198
    %v515 = vpop.f32.mrf.mxu0
    %v516 = vadd.f32 %v110, %v515
    %v517 = vpop.f32.mrf.mxu0
    %518 = vmatprep.mubr.f32.mxu0 0.0
    %519 = vmatmul.mubr.f32.gmra.mxu0 %v201
    %v520 = vpop.f32.mrf.mxu0
    %v521 = vadd.f32 %v110, %v520
    %v522 = vpop.f32.mrf.mxu0
    %523 = vmatprep.mubr.f32.mxu0 0.0
    %524 = vmatmul.mubr.f32.gmra.mxu0 %v204
    %v525 = vpop.f32.mrf.mxu0
    %v526 = vadd.f32 %v110, %v525
    %v527 = vpop.f32.mrf.mxu0
    %528 = vmatprep.mubr.f32.mxu0 0.0
    %529 = vmatmul.mubr.f32.gmra.mxu0 %v207
    %v530 = vpop.f32.mrf.mxu0
    %v531 = vadd.f32 %v110, %v530
    %v532 = vpop.f32.mrf.mxu0
    %533 = vmatprep.mubr.f32.mxu0 0.0
    %534 = vmatmul.mubr.f32.gmra.mxu0 %v210
    %v535 = vpop.f32.mrf.mxu0
    %v536 = vadd.f32 %v110, %v535
    %v537 = vpop.f32.mrf.mxu0
    %538 = vmatprep.mubr.f32.mxu0 0.0
    %539 = vmatmul.mubr.f32.gmra.mxu0 %v213
    %v540 = vpop.f32.mrf.mxu0
    %v541 = vadd.f32 %v110, %v540
    %v542 = vpop.f32.mrf.mxu0
    %543 = vmatprep.mubr.f32.mxu0 0.0
    %544 = vmatmul.mubr.f32.gmra.mxu0 %v216
    %v545 = vpop.f32.mrf.mxu0
    %v546 = vadd.f32 %v110, %v545
    %v547 = vpop.f32.mrf.mxu0
    %548 = vmatprep.mubr.f32.mxu0 0.0
    %549 = vmatmul.mubr.f32.gmra.mxu0 %v219
    %v550 = vpop.f32.mrf.mxu0
    %v551 = vadd.f32 %v110, %v550
    %v552 = vpop.f32.mrf.mxu0
    %553 = vmatprep.mubr.f32.mxu0 0.0
    %554 = vmatmul.mubr.f32.gmra.mxu0 %v222
    %v555 = vpop.f32.mrf.mxu0
    %v556 = vadd.f32 %v110, %v555
    %v557 = vpop.f32.mrf.mxu0
    %558 = vmatprep.mubr.f32.mxu0 0.0
    %559 = vmatmul.mubr.f32.gmra.mxu0 %v225
    %v560 = vpop.f32.mrf.mxu0
    %v561 = vadd.f32 %v110, %v560
    %v562 = vpop.f32.mrf.mxu0
    %563 = vmatprep.mubr.f32.mxu0 0.0
    %564 = vmatmul.mubr.f32.gmra.mxu0 %v228
    %v565 = vpop.f32.mrf.mxu0
    %v566 = vadd.f32 %v110, %v565
    %v567 = vpop.f32.mrf.mxu0
    %568 = vmatprep.mubr.f32.mxu0 0.0
    %569 = vmatmul.mubr.f32.gmra.mxu0 %v231
    %v570 = vpop.f32.mrf.mxu0
    %v571 = vadd.f32 %v110, %v570
    %v572 = vpop.f32.mrf.mxu0
    %573 = vmatprep.mubr.f32.mxu0 0.0
    %574 = vmatmul.mubr.f32.gmra.mxu0 %v234
    %v575 = vpop.f32.mrf.mxu0
    %v576 = vadd.f32 %v110, %v575
    %v577 = vpop.f32.mrf.mxu0
    %578 = vmatprep.mubr.f32.mxu0 0.0
    %579 = vmatmul.mubr.f32.gmra.mxu0 %v237
    %v580 = vpop.f32.mrf.mxu0
    %v581 = vadd.f32 %v110, %v580
    %v582 = vpop.f32.mrf.mxu0
    %583 = vmatprep.mubr.f32.mxu0 0.0
    %584 = vmatmul.mubr.f32.gmra.mxu0 %v240
    %v585 = vpop.f32.mrf.mxu0
    %v586 = vadd.f32 %v110, %v585
    %v587 = vpop.f32.mrf.mxu0
    %588 = vmatprep.mubr.f32.mxu0 0.0
    %589 = vmatmul.mubr.f32.gmra.mxu0 %v243
    %v590 = vpop.f32.mrf.mxu0
    %v591 = vadd.f32 %v110, %v590
    %v592 = vpop.f32.mrf.mxu0
    %593 = vmatprep.mubr.f32.mxu0 0.0
    %594 = vmatmul.mubr.f32.gmra.mxu0 %v246
    %v595 = vpop.f32.mrf.mxu0
    %v596 = vadd.f32 %v110, %v595
    %v597 = vpop.f32.mrf.mxu0
    %598 = vmatprep.mubr.f32.mxu0 0.0
    %599 = vmatmul.mubr.f32.gmra.mxu0 %v249
    %v600 = vpop.f32.mrf.mxu0
    %v601 = vadd.f32 %v110, %v600
    %v602 = vpop.f32.mrf.mxu0
    %603 = vmatprep.mubr.f32.mxu0 0.0
    %604 = vmatmul.mubr.f32.gmra.mxu0 %v252
    %v605 = vpop.f32.mrf.mxu0
    %v606 = vadd.f32 %v110, %v605
    %v607 = vpop.f32.mrf.mxu0
    %608 = vmatprep.mubr.f32.mxu0 0.0
    %609 = vmatmul.mubr.f32.gmra.mxu0 %v255
    %v610 = vpop.f32.mrf.mxu0
    %v611 = vadd.f32 %v110, %v610
    %v612 = vpop.f32.mrf.mxu0
    %613 = vmatprep.mubr.f32.mxu0 0.0
    %614 = vmatmul.mubr.f32.gmra.mxu0 %v258
    %v615 = vpop.f32.mrf.mxu0
    %v616 = vadd.f32 %v110, %v615
    %v617 = vpop.f32.mrf.mxu0
    %618 = vmatprep.mubr.f32.mxu0 0.0
    %619 = vmatmul.mubr.f32.gmra.mxu0 %v261
    %v620 = vpop.f32.mrf.mxu0
    %v621 = vadd.f32 %v110, %v620
    %v622 = vpop.f32.mrf.mxu0
    %623 = vmatprep.mubr.f32.mxu0 0.0
    %624 = vmatmul.mubr.f32.gmra.mxu0 %v264
    %v625 = vpop.f32.mrf.mxu0
    %v626 = vadd.f32 %v110, %v625
    %v627 = vpop.f32.mrf.mxu0
    %628 = vmatprep.mubr.f32.mxu0 0.0
    %629 = vmatmul.mubr.f32.gmra.mxu0 %v267
    %v630 = vpop.f32.mrf.mxu0
    %v631 = vadd.f32 %v110, %v630
    %v632 = vpop.f32.mrf.mxu0
    %633 = vmatprep.mubr.f32.mxu0 0.0
    %634 = vmatmul.mubr.f32.gmra.mxu0 %v270
    %v635 = vpop.f32.mrf.mxu0
    %v636 = vadd.f32 %v110, %v635
    %v637 = vpop.f32.mrf.mxu0
    %638 = vmatprep.mubr.f32.mxu0 0.0
    %639 = vmatmul.mubr.f32.gmra.mxu0 %v273
    %v640 = vpop.f32.mrf.mxu0
    %v641 = vadd.f32 %v110, %v640
    %v642 = vpop.f32.mrf.mxu0
    %643 = vmatprep.mubr.f32.mxu0 0.0
    %644 = vmatmul.mubr.f32.gmra.mxu0 %v276
    %v645 = vpop.f32.mrf.mxu0
    %v646 = vadd.f32 %v110, %v645
    %v647 = vpop.f32.mrf.mxu0
    %648 = vmatprep.mubr.f32.mxu0 0.0
    %649 = vmatmul.mubr.f32.gmra.mxu0 %v279
    %v650 = vpop.f32.mrf.mxu0
    %v651 = vadd.f32 %v110, %v650
    %v652 = vpop.f32.mrf.mxu0
    %653 = vmatprep.mubr.f32.mxu0 0.0
    %654 = vmatmul.mubr.f32.gmra.mxu0 %v282
    %v655 = vpop.f32.mrf.mxu0
    %v656 = vadd.f32 %v110, %v655
    %v657 = vpop.f32.mrf.mxu0
    %658 = vmatprep.mubr.f32.mxu0 0.0
    %659 = vmatmul.mubr.f32.gmra.mxu0 %v285
    %v660 = vpop.f32.mrf.mxu0
    %v661 = vadd.f32 %v110, %v660
    %v662 = vpop.f32.mrf.mxu0
    %663 = vmatprep.mubr.f32.mxu0 0.0
    %664 = vmatmul.mubr.f32.gmra.mxu0 %v288
    %v665 = vpop.f32.mrf.mxu0
    %v666 = vadd.f32 %v110, %v665
    %v667 = vpop.f32.mrf.mxu0
    %668 = vmatprep.mubr.f32.mxu0 0.0
    %669 = vmatmul.mubr.f32.gmra.mxu0 %v291
    %v670 = vpop.f32.mrf.mxu0
    %v671 = vadd.f32 %v110, %v670
    %v672 = vpop.f32.mrf.mxu0
    %673 = vmatprep.mubr.f32.mxu0 0.0
    %674 = vmatmul.mubr.f32.gmra.mxu0 %v294
    %v675 = vpop.f32.mrf.mxu0
    %v676 = vadd.f32 %v110, %v675
    %v677 = vpop.f32.mrf.mxu0
    %678 = vmatprep.mubr.f32.mxu0 0.0
    %679 = vmatmul.mubr.f32.gmra.mxu0 %v297
    %v680 = vpop.f32.mrf.mxu0
    %v681 = vadd.f32 %v110, %v680
    %v682 = vpop.f32.mrf.mxu0
    %683 = vmatprep.mubr.f32.mxu0 0.0
    %684 = vmatmul.mubr.f32.gmra.mxu0 %v300
    %v685 = vpop.f32.mrf.mxu0
    %v686 = vadd.f32 %v110, %v685
    %v687 = vpop.f32.mrf.mxu0
    %688 = vmatprep.mubr.f32.mxu0 0.0
    %689 = vmatmul.mubr.f32.gmra.mxu0 %v303
    %v690 = vpop.f32.mrf.mxu0
    %v691 = vadd.f32 %v110, %v690
    %v692 = vpop.f32.mrf.mxu0
    %693 = vdwg.mxu0
    %v694 = vmax.f32 %v376, 0.0
    %v695 = vmax.f32 %v381, 0.0
    %v696 = vmax.f32 %v386, 0.0
    %v697 = vmax.f32 %v391, 0.0
    %v698 = vmax.f32 %v396, 0.0
    %v699 = vmax.f32 %v401, 0.0
    %v700 = vmax.f32 %v406, 0.0
    %v701 = vmax.f32 %v411, 0.0
    %v702 = vmax.f32 %v416, 0.0
    %v703 = vmax.f32 %v421, 0.0
    %v704 = vmax.f32 %v426, 0.0
    %v705 = vmax.f32 %v431, 0.0
    %v706 = vmax.f32 %v436, 0.0
    %v707 = vmax.f32 %v441, 0.0
    %v708 = vmax.f32 %v446, 0.0
    %v709 = vmax.f32 %v451, 0.0
    %v710 = vmax.f32 %v456, 0.0
    %v711 = vmax.f32 %v461, 0.0
    %v712 = vmax.f32 %v466, 0.0
    %v713 = vmax.f32 %v471, 0.0
    %v714 = vmax.f32 %v476, 0.0
    %v715 = vmax.f32 %v481, 0.0
    %v716 = vmax.f32 %v486, 0.0
    %v717 = vmax.f32 %v491, 0.0
    %v718 = vmax.f32 %v496, 0.0
    %v719 = vmax.f32 %v501, 0.0
    %v720 = vmax.f32 %v506, 0.0
    %v721 = vmax.f32 %v511, 0.0
    %v722 = vmax.f32 %v516, 0.0
    %v723 = vmax.f32 %v521, 0.0
    %v724 = vmax.f32 %v526, 0.0
    %v725 = vmax.f32 %v531, 0.0
    %v726 = vmax.f32 %v536, 0.0
    %v727 = vmax.f32 %v541, 0.0
    %v728 = vmax.f32 %v546, 0.0
    %v729 = vmax.f32 %v551, 0.0
    %v730 = vmax.f32 %v556, 0.0
    %v731 = vmax.f32 %v561, 0.0
    %v732 = vmax.f32 %v566, 0.0
    %v733 = vmax.f32 %v571, 0.0
    %v734 = vmax.f32 %v576, 0.0
    %v735 = vmax.f32 %v581, 0.0
    %v736 = vmax.f32 %v586, 0.0
    %v737 = vmax.f32 %v591, 0.0
    %v738 = vmax.f32 %v596, 0.0
    %v739 = vmax.f32 %v601, 0.0
    %v740 = vmax.f32 %v606, 0.0
    %v741 = vmax.f32 %v611, 0.0
    %v742 = vmax.f32 %v616, 0.0
    %v743 = vmax.f32 %v621, 0.0
    %v744 = vmax.f32 %v626, 0.0
    %v745 = vmax.f32 %v631, 0.0
    %v746 = vmax.f32 %v636, 0.0
    %v747 = vmax.f32 %v641, 0.0
    %v748 = vmax.f32 %v646, 0.0
    %v749 = vmax.f32 %v651, 0.0
    %v750 = vmax.f32 %v656, 0.0
    %v751 = vmax.f32 %v661, 0.0
    %v752 = vmax.f32 %v666, 0.0
    %v753 = vmax.f32 %v671, 0.0
    %v754 = vmax.f32 %v676, 0.0
    %v755 = vmax.f32 %v681, 0.0
    %v756 = vmax.f32 %v686, 0.0
    %v757 = vmax.f32 %v691, 0.0
    %vm758 = vcmask 523264
    %v759 = vsel %vm758, %v694, 0.0
    %v760 = vsel %vm758, %v695, 0.0
    %v761 = vadd.f32 %v759, %v760
    %v762 = vsel %vm758, %v696, 0.0
    %v763 = vadd.f32 %v761, %v762
    %v764 = vsel %vm758, %v697, 0.0
    %v765 = vadd.f32 %v763, %v764
    %v766 = vsel %vm758, %v698, 0.0
    %v767 = vadd.f32 %v765, %v766
    %v768 = vsel %vm758, %v699, 0.0
    %v769 = vadd.f32 %v767, %v768
    %v770 = vsel %vm758, %v700, 0.0
    %v771 = vadd.f32 %v769, %v770
    %v772 = vsel %vm758, %v701, 0.0
    %v773 = vadd.f32 %v771, %v772
    %v774 = vsel %vm758, %v702, 0.0
    %v775 = vadd.f32 %v773, %v774
    %v776 = vsel %vm758, %v703, 0.0
    %v777 = vadd.f32 %v775, %v776
    %v778 = vsel %vm758, %v704, 0.0
    %v779 = vadd.f32 %v777, %v778
    %v780 = vsel %vm758, %v705, 0.0
    %v781 = vadd.f32 %v779, %v780
    %v782 = vsel %vm758, %v706, 0.0
    %v783 = vadd.f32 %v781, %v782
    %v784 = vsel %vm758, %v707, 0.0
    %v785 = vadd.f32 %v783, %v784
    %v786 = vsel %vm758, %v708, 0.0
    %v787 = vadd.f32 %v785, %v786
    %v788 = vsel %vm758, %v709, 0.0
    %v789 = vadd.f32 %v787, %v788
    %v790 = vsel %vm758, %v710, 0.0
    %v791 = vadd.f32 %v789, %v790
    %v792 = vsel %vm758, %v711, 0.0
    %v793 = vadd.f32 %v791, %v792
    %v794 = vsel %vm758, %v712, 0.0
    %v795 = vadd.f32 %v793, %v794
    %v796 = vsel %vm758, %v713, 0.0
    %v797 = vadd.f32 %v795, %v796
    %v798 = vsel %vm758, %v714, 0.0
    %v799 = vadd.f32 %v797, %v798
    %v800 = vsel %vm758, %v715, 0.0
    %v801 = vadd.f32 %v799, %v800
    %v802 = vsel %vm758, %v716, 0.0
    %v803 = vadd.f32 %v801, %v802
    %v804 = vsel %vm758, %v717, 0.0
    %v805 = vadd.f32 %v803, %v804
    %v806 = vsel %vm758, %v718, 0.0
    %v807 = vadd.f32 %v805, %v806
    %v808 = vsel %vm758, %v719, 0.0
    %v809 = vadd.f32 %v807, %v808
    %v810 = vsel %vm758, %v720, 0.0
    %v811 = vadd.f32 %v809, %v810
    %v812 = vsel %vm758, %v721, 0.0
    %v813 = vadd.f32 %v811, %v812
    %v814 = vsel %vm758, %v722, 0.0
    %v815 = vadd.f32 %v813, %v814
    %v816 = vsel %vm758, %v723, 0.0
    %v817 = vadd.f32 %v815, %v816
    %v818 = vsel %vm758, %v724, 0.0
    %v819 = vadd.f32 %v817, %v818
    %v820 = vsel %vm758, %v725, 0.0
    %v821 = vadd.f32 %v819, %v820
    %v822 = vrot.slane %v821, 4
    %v823 = vadd.f32 %v821, %v822
    %v824 = vrot.slane %v823, 2
    %v825 = vadd.f32 %v823, %v824
    %v826 = vrot.slane %v825, 1
    %v827 = vadd.f32 %v825, %v826
    %v828 = vrcp.pop 256.0
    %v829 = vmul.f32 %v827, %v828
    %v830 = vsel %vm758, %v726, 0.0
    %v831 = vsel %vm758, %v727, 0.0
    %v832 = vadd.f32 %v830, %v831
    %v833 = vsel %vm758, %v728, 0.0
    %v834 = vadd.f32 %v832, %v833
    %v835 = vsel %vm758, %v729, 0.0
    %v836 = vadd.f32 %v834, %v835
    %v837 = vsel %vm758, %v730, 0.0
    %v838 = vadd.f32 %v836, %v837
    %v839 = vsel %vm758, %v731, 0.0
    %v840 = vadd.f32 %v838, %v839
    %v841 = vsel %vm758, %v732, 0.0
    %v842 = vadd.f32 %v840, %v841
    %v843 = vsel %vm758, %v733, 0.0
    %v844 = vadd.f32 %v842, %v843
    %v845 = vsel %vm758, %v734, 0.0
    %v846 = vadd.f32 %v844, %v845
    %v847 = vsel %vm758, %v735, 0.0
    %v848 = vadd.f32 %v846, %v847
    %v849 = vsel %vm758, %v736, 0.0
    %v850 = vadd.f32 %v848, %v849
    %v851 = vsel %vm758, %v737, 0.0
    %v852 = vadd.f32 %v850, %v851
    %v853 = vsel %vm758, %v738, 0.0
    %v854 = vadd.f32 %v852, %v853
    %v855 = vsel %vm758, %v739, 0.0
    %v856 = vadd.f32 %v854, %v855
    %v857 = vsel %vm758, %v740, 0.0
    %v858 = vadd.f32 %v856, %v857
    %v859 = vsel %vm758, %v741, 0.0
    %v860 = vadd.f32 %v858, %v859
    %v861 = vsel %vm758, %v742, 0.0
    %v862 = vadd.f32 %v860, %v861
    %v863 = vsel %vm758, %v743, 0.0
    %v864 = vadd.f32 %v862, %v863
    %v865 = vsel %vm758, %v744, 0.0
    %v866 = vadd.f32 %v864, %v865
    %v867 = vsel %vm758, %v745, 0.0
    %v868 = vadd.f32 %v866, %v867
    %v869 = vsel %vm758, %v746, 0.0
    %v870 = vadd.f32 %v868, %v869
    %v871 = vsel %vm758, %v747, 0.0
    %v872 = vadd.f32 %v870, %v871
    %v873 = vsel %vm758, %v748, 0.0
    %v874 = vadd.f32 %v872, %v873
    %v875 = vsel %vm758, %v749, 0.0
    %v876 = vadd.f32 %v874, %v875
    %v877 = vsel %vm758, %v750, 0.0
    %v878 = vadd.f32 %v876, %v877
    %v879 = vsel %vm758, %v751, 0.0
    %v880 = vadd.f32 %v878, %v879
    %v881 = vsel %vm758, %v752, 0.0
    %v882 = vadd.f32 %v880, %v881
    %v883 = vsel %vm758, %v753, 0.0
    %v884 = vadd.f32 %v882, %v883
    %v885 = vsel %vm758, %v754, 0.0
    %v886 = vadd.f32 %v884, %v885
    %v887 = vsel %vm758, %v755, 0.0
    %v888 = vadd.f32 %v886, %v887
    %v889 = vsel %vm758, %v756, 0.0
    %v890 = vadd.f32 %v888, %v889
    %v891 = vsel %vm758, %v757, 0.0
    %v892 = vadd.f32 %v890, %v891
    %v893 = vrot.slane %v892, 4
    %v894 = vadd.f32 %v892, %v893
    %v895 = vrot.slane %v894, 2
    %v896 = vadd.f32 %v894, %v895
    %v897 = vrot.slane %v896, 1
    %v898 = vadd.f32 %v896, %v897
    %v899 = vmul.f32 %v898, %v828
    %vm900 = vcmask 1040384
    %v901 = vsel %vm900, %v829, %v899
    %v902 = vld [vmem:[%s4] sm:$0xff]
    %v903 = vld [vmem:[%s4 + $0x8] sm:$0xff]
    %v904 = vld [vmem:[%s3] sm:$0xff]
    %v905 = vld [vmem:[%s3 + $0x8] sm:$0xff]
    %907 = vset.pattern.permute.xlu0 0
    %908 = vperm.xlu0 %907, %v902
    %v909 = vpop.permute.xlu0 %908
    %912 = vset.pattern.permute.xlu0 0
    %913 = vperm.xlu0 %912, %v903
    %v914 = vpop.permute.xlu0 %913
    %v916 = vmul.f32 %v904, %v909
    %v917 = vmul.f32 %v905, %v914
    %vm918 = vcmask 261120
    %v919 = vsel %vm918, %v916, 0.0
    %v920 = vrot.slane %v919, 4
    %v921 = vadd.f32 %v919, %v920
    %v922 = vrot.slane %v921, 2
    %v923 = vadd.f32 %v921, %v922
    %v924 = vrot.slane %v923, 1
    %v925 = vadd.f32 %v923, %v924
    %vm926 = vcmask 7168
    %v927 = vsel %vm926, %v902, 0.0
    %v928 = vrot.slane %v927, 4
    %v929 = vadd.f32 %v927, %v928
    %v930 = vrot.slane %v929, 2
    %v931 = vadd.f32 %v929, %v930
    %v932 = vrot.slane %v931, 1
    %v933 = vadd.f32 %v931, %v932
    %v934 = vadd.f32 %v933, 1e-06
    %v935 = vrcp.pop %v934
    %937 = vset.pattern.permute.xlu0 0
    %938 = vperm.xlu0 %937, %v935
    %v939 = vpop.permute.xlu0 %938
    %v941 = vmul.f32 %v925, %v939
    %v942 = vsel %vm918, %v917, 0.0
    %v943 = vrot.slane %v942, 4
    %v944 = vadd.f32 %v942, %v943
    %v945 = vrot.slane %v944, 2
    %v946 = vadd.f32 %v944, %v945
    %v947 = vrot.slane %v946, 1
    %v948 = vadd.f32 %v946, %v947
    %v949 = vsel %vm926, %v903, 0.0
    %v950 = vrot.slane %v949, 4
    %v951 = vadd.f32 %v949, %v950
    %v952 = vrot.slane %v951, 2
    %v953 = vadd.f32 %v951, %v952
    %v954 = vrot.slane %v953, 1
    %v955 = vadd.f32 %v953, %v954
    %v956 = vadd.f32 %v955, 1e-06
    %v957 = vrcp.pop %v956
    %959 = vset.pattern.permute.xlu0 0
    %960 = vperm.xlu0 %959, %v957
    %v961 = vpop.permute.xlu0 %960
    %v963 = vmul.f32 %v948, %v961
    %v964 = vsel %vm900, %v941, %v963
    %v965 = vld [vmem:[%s5] sm:$0xff]
    %v966 = vld [vmem:[%s5 + $0x8] sm:$0xff]
    %v967 = vld [vmem:[%s5 + $0x10] sm:$0xff]
    %v968 = vld [vmem:[%s5 + $0x18] sm:$0xff]
    %v969 = vld [vmem:[%s5 + $0x20] sm:$0xff]
    %v970 = vld [vmem:[%s5 + $0x28] sm:$0xff]
    %v971 = vld [vmem:[%s5 + $0x30] sm:$0xff]
    %v972 = vld [vmem:[%s5 + $0x38] sm:$0xff]
    %v973 = vld [vmem:[%s5 + $0x40] sm:$0xff]
    %v974 = vld [vmem:[%s5 + $0x48] sm:$0xff]
    %v975 = vld [vmem:[%s5 + $0x50] sm:$0xff]
    %v976 = vld [vmem:[%s5 + $0x58] sm:$0xff]
    %v977 = vld [vmem:[%s5 + $0x60] sm:$0xff]
    %v978 = vld [vmem:[%s5 + $0x68] sm:$0xff]
    %v979 = vld [vmem:[%s5 + $0x70] sm:$0xff]
    %v980 = vld [vmem:[%s5 + $0x78] sm:$0xff]
    %v981 = vld [vmem:[%s5 + $0x80] sm:$0xff]
    %v982 = vld [vmem:[%s5 + $0x88] sm:$0xff]
    %v983 = vld [vmem:[%s5 + $0x90] sm:$0xff]
    %v984 = vld [vmem:[%s5 + $0x98] sm:$0xff]
    %v985 = vld [vmem:[%s5 + $0xa0] sm:$0xff]
    %v986 = vld [vmem:[%s5 + $0xa8] sm:$0xff]
    %v987 = vld [vmem:[%s5 + $0xb0] sm:$0xff]
    %v988 = vld [vmem:[%s5 + $0xb8] sm:$0xff]
    %v989 = vld [vmem:[%s6] sm:$0x3f]
    %v991 = vlaneseq
    %v992 = vshrl.u32 %v991, 7
    %v993 = vsub.s32 0, %v992
    %v994 = vrot.slane %v989, %v993
    %v995 = vlaneseq
    %v996 = vshrl.u32 %v995, 7
    %v997 = vsub.s32 1, %v996
    %v998 = vrot.slane %v989, %v997
    %v999 = vlaneseq
    %v1000 = vshrl.u32 %v999, 7
    %v1001 = vsub.s32 2, %v1000
    %v1002 = vrot.slane %v989, %v1001
    %v1003 = vlaneseq
    %v1004 = vshrl.u32 %v1003, 7
    %v1005 = vsub.s32 3, %v1004
    %v1006 = vrot.slane %v989, %v1005
    %v1007 = vlaneseq
    %v1008 = vshrl.u32 %v1007, 7
    %v1009 = vsub.s32 4, %v1008
    %v1010 = vrot.slane %v989, %v1009
    %v1011 = vlaneseq
    %v1012 = vshrl.u32 %v1011, 7
    %v1013 = vsub.s32 5, %v1012
    %v1014 = vrot.slane %v989, %v1013
    %v1022 = vsel %vm918, %v964, 0
    %1024 = vmatprep.subr.mxu0 0.0
    %1025 = vmatpush1.msra.mxu0 0.0
    %1026 = vmatprep.subr.mxu0 0.0
    %1027 = vmatpush1.msra.mxu0 0.0
    %1028 = vmatprep.subr.mxu0 0.0
    %1029 = vmatpush1.msra.mxu0 0.0
    %1030 = vmatprep.subr.mxu0 0.0
    %1031 = vmatpush1.msra.mxu0 0.0
    %1032 = vmatprep.subr.mxu0 0.0
    %1033 = vmatpush1.msra.mxu0 0.0
    %1034 = vmatprep.subr.mxu0 0.0
    %1035 = vmatpush1.msra.mxu0 0.0
    %1036 = vmatprep.subr.mxu0 0.0
    %1037 = vmatpush1.msra.mxu0 0.0
    %1038 = vmatprep.subr.mxu0 0.0
    %1039 = vmatpush1.msra.mxu0 0.0
    %1040 = vmatprep.subr.mxu0 0.0
    %1041 = vmatpush1.msra.mxu0 0.0
    %1042 = vmatprep.subr.mxu0 0.0
    %1043 = vmatpush1.msra.mxu0 0.0
    %1044 = vmatprep.subr.mxu0 0.0
    %1045 = vmatpush1.msra.mxu0 0.0
    %1046 = vmatprep.subr.mxu0 0.0
    %1047 = vmatpush1.msra.mxu0 0.0
    %1048 = vmatprep.subr.mxu0 %v984
    %1049 = vmatpush1.msra.mxu0 %v983
    %1050 = vmatprep.subr.mxu0 %v978
    %1051 = vmatpush1.msra.mxu0 %v977
    %1052 = vmatprep.subr.mxu0 %v972
    %1053 = vmatpush1.msra.mxu0 %v971
    %1054 = vmatprep.subr.mxu0 %v966
    %1055 = vmatpush1.msra.mxu0 %v965
    %1056 = vmatprep.subr.mxu0 0.0
    %1057 = vmatpush2.msra.mxu0 0.0
    %1058 = vmatprep.subr.mxu0 0.0
    %1059 = vmatpush2.msra.mxu0 0.0
    %1060 = vmatprep.subr.mxu0 0.0
    %1061 = vmatpush2.msra.mxu0 0.0
    %1062 = vmatprep.subr.mxu0 0.0
    %1063 = vmatpush2.msra.mxu0 0.0
    %1064 = vmatprep.subr.mxu0 0.0
    %1065 = vmatpush2.msra.mxu0 0.0
    %1066 = vmatprep.subr.mxu0 0.0
    %1067 = vmatpush2.msra.mxu0 0.0
    %1068 = vmatprep.subr.mxu0 0.0
    %1069 = vmatpush2.msra.mxu0 0.0
    %1070 = vmatprep.subr.mxu0 0.0
    %1071 = vmatpush2.msra.mxu0 0.0
    %1072 = vmatprep.subr.mxu0 0.0
    %1073 = vmatpush2.msra.mxu0 0.0
    %1074 = vmatprep.subr.mxu0 0.0
    %1075 = vmatpush2.msra.mxu0 0.0
    %1076 = vmatprep.subr.mxu0 0.0
    %1077 = vmatpush2.msra.mxu0 0.0
    %1078 = vmatprep.subr.mxu0 0.0
    %1079 = vmatpush2.msra.mxu0 0.0
    %1080 = vmatprep.subr.mxu0 0.0
    %1081 = vmatpush2.msra.mxu0 0.0
    %1082 = vmatprep.subr.mxu0 0.0
    %1083 = vmatpush2.msra.mxu0 0.0
    %1084 = vmatprep.subr.mxu0 0.0
    %1085 = vmatpush2.msra.mxu0 0.0
    %1086 = vmatprep.subr.mxu0 0.0
    %1087 = vmatpush2.msra.mxu0 0.0
    %1088 = vmatprep.mubr.f32.mxu0 0.0
    %1089 = vmatmul.mubr.f32.gmra.mxu0 %v1022
    %v1090 = vpop.f32.mrf.mxu0
    %v1091 = vadd.f32 %v994, %v1090
    %v1092 = vpop.f32.mrf.mxu0
    %v1093 = vadd.f32 %v998, %v1092
    %1094 = vdwg.mxu0
    %1095 = vmatprep.subr.mxu0 0.0
    %1096 = vmatpush1.msra.mxu0 0.0
    %1097 = vmatprep.subr.mxu0 0.0
    %1098 = vmatpush1.msra.mxu0 0.0
    %1099 = vmatprep.subr.mxu0 0.0
    %1100 = vmatpush1.msra.mxu0 0.0
    %1101 = vmatprep.subr.mxu0 0.0
    %1102 = vmatpush1.msra.mxu0 0.0
    %1103 = vmatprep.subr.mxu0 0.0
    %1104 = vmatpush1.msra.mxu0 0.0
    %1105 = vmatprep.subr.mxu0 0.0
    %1106 = vmatpush1.msra.mxu0 0.0
    %1107 = vmatprep.subr.mxu0 0.0
    %1108 = vmatpush1.msra.mxu0 0.0
    %1109 = vmatprep.subr.mxu0 0.0
    %1110 = vmatpush1.msra.mxu0 0.0
    %1111 = vmatprep.subr.mxu0 0.0
    %1112 = vmatpush1.msra.mxu0 0.0
    %1113 = vmatprep.subr.mxu0 0.0
    %1114 = vmatpush1.msra.mxu0 0.0
    %1115 = vmatprep.subr.mxu0 0.0
    %1116 = vmatpush1.msra.mxu0 0.0
    %1117 = vmatprep.subr.mxu0 0.0
    %1118 = vmatpush1.msra.mxu0 0.0
    %1119 = vmatprep.subr.mxu0 %v986
    %1120 = vmatpush1.msra.mxu0 %v985
    %1121 = vmatprep.subr.mxu0 %v980
    %1122 = vmatpush1.msra.mxu0 %v979
    %1123 = vmatprep.subr.mxu0 %v974
    %1124 = vmatpush1.msra.mxu0 %v973
    %1125 = vmatprep.subr.mxu0 %v968
    %1126 = vmatpush1.msra.mxu0 %v967
    %1127 = vmatprep.subr.mxu0 0.0
    %1128 = vmatpush2.msra.mxu0 0.0
    %1129 = vmatprep.subr.mxu0 0.0
    %1130 = vmatpush2.msra.mxu0 0.0
    %1131 = vmatprep.subr.mxu0 0.0
    %1132 = vmatpush2.msra.mxu0 0.0
    %1133 = vmatprep.subr.mxu0 0.0
    %1134 = vmatpush2.msra.mxu0 0.0
    %1135 = vmatprep.subr.mxu0 0.0
    %1136 = vmatpush2.msra.mxu0 0.0
    %1137 = vmatprep.subr.mxu0 0.0
    %1138 = vmatpush2.msra.mxu0 0.0
    %1139 = vmatprep.subr.mxu0 0.0
    %1140 = vmatpush2.msra.mxu0 0.0
    %1141 = vmatprep.subr.mxu0 0.0
    %1142 = vmatpush2.msra.mxu0 0.0
    %1143 = vmatprep.subr.mxu0 0.0
    %1144 = vmatpush2.msra.mxu0 0.0
    %1145 = vmatprep.subr.mxu0 0.0
    %1146 = vmatpush2.msra.mxu0 0.0
    %1147 = vmatprep.subr.mxu0 0.0
    %1148 = vmatpush2.msra.mxu0 0.0
    %1149 = vmatprep.subr.mxu0 0.0
    %1150 = vmatpush2.msra.mxu0 0.0
    %1151 = vmatprep.subr.mxu0 0.0
    %1152 = vmatpush2.msra.mxu0 0.0
    %1153 = vmatprep.subr.mxu0 0.0
    %1154 = vmatpush2.msra.mxu0 0.0
    %1155 = vmatprep.subr.mxu0 0.0
    %1156 = vmatpush2.msra.mxu0 0.0
    %1157 = vmatprep.subr.mxu0 0.0
    %1158 = vmatpush2.msra.mxu0 0.0
    %1159 = vmatprep.mubr.f32.mxu0 0.0
    %1160 = vmatmul.mubr.f32.gmra.mxu0 %v1022
    %v1161 = vpop.f32.mrf.mxu0
    %v1162 = vadd.f32 %v1002, %v1161
    %v1163 = vpop.f32.mrf.mxu0
    %v1164 = vadd.f32 %v1006, %v1163
    %1165 = vdwg.mxu0
    %1166 = vmatprep.subr.mxu0 0.0
    %1167 = vmatpush1.msra.mxu0 0.0
    %1168 = vmatprep.subr.mxu0 0.0
    %1169 = vmatpush1.msra.mxu0 0.0
    %1170 = vmatprep.subr.mxu0 0.0
    %1171 = vmatpush1.msra.mxu0 0.0
    %1172 = vmatprep.subr.mxu0 0.0
    %1173 = vmatpush1.msra.mxu0 0.0
    %1174 = vmatprep.subr.mxu0 0.0
    %1175 = vmatpush1.msra.mxu0 0.0
    %1176 = vmatprep.subr.mxu0 0.0
    %1177 = vmatpush1.msra.mxu0 0.0
    %1178 = vmatprep.subr.mxu0 0.0
    %1179 = vmatpush1.msra.mxu0 0.0
    %1180 = vmatprep.subr.mxu0 0.0
    %1181 = vmatpush1.msra.mxu0 0.0
    %1182 = vmatprep.subr.mxu0 0.0
    %1183 = vmatpush1.msra.mxu0 0.0
    %1184 = vmatprep.subr.mxu0 0.0
    %1185 = vmatpush1.msra.mxu0 0.0
    %1186 = vmatprep.subr.mxu0 0.0
    %1187 = vmatpush1.msra.mxu0 0.0
    %1188 = vmatprep.subr.mxu0 0.0
    %1189 = vmatpush1.msra.mxu0 0.0
    %1190 = vmatprep.subr.mxu0 %v988
    %1191 = vmatpush1.msra.mxu0 %v987
    %1192 = vmatprep.subr.mxu0 %v982
    %1193 = vmatpush1.msra.mxu0 %v981
    %1194 = vmatprep.subr.mxu0 %v976
    %1195 = vmatpush1.msra.mxu0 %v975
    %1196 = vmatprep.subr.mxu0 %v970
    %1197 = vmatpush1.msra.mxu0 %v969
    %1198 = vmatprep.subr.mxu0 0.0
    %1199 = vmatpush2.msra.mxu0 0.0
    %1200 = vmatprep.subr.mxu0 0.0
    %1201 = vmatpush2.msra.mxu0 0.0
    %1202 = vmatprep.subr.mxu0 0.0
    %1203 = vmatpush2.msra.mxu0 0.0
    %1204 = vmatprep.subr.mxu0 0.0
    %1205 = vmatpush2.msra.mxu0 0.0
    %1206 = vmatprep.subr.mxu0 0.0
    %1207 = vmatpush2.msra.mxu0 0.0
    %1208 = vmatprep.subr.mxu0 0.0
    %1209 = vmatpush2.msra.mxu0 0.0
    %1210 = vmatprep.subr.mxu0 0.0
    %1211 = vmatpush2.msra.mxu0 0.0
    %1212 = vmatprep.subr.mxu0 0.0
    %1213 = vmatpush2.msra.mxu0 0.0
    %1214 = vmatprep.subr.mxu0 0.0
    %1215 = vmatpush2.msra.mxu0 0.0
    %1216 = vmatprep.subr.mxu0 0.0
    %1217 = vmatpush2.msra.mxu0 0.0
    %1218 = vmatprep.subr.mxu0 0.0
    %1219 = vmatpush2.msra.mxu0 0.0
    %1220 = vmatprep.subr.mxu0 0.0
    %1221 = vmatpush2.msra.mxu0 0.0
    %1222 = vmatprep.subr.mxu0 0.0
    %1223 = vmatpush2.msra.mxu0 0.0
    %1224 = vmatprep.subr.mxu0 0.0
    %1225 = vmatpush2.msra.mxu0 0.0
    %1226 = vmatprep.subr.mxu0 0.0
    %1227 = vmatpush2.msra.mxu0 0.0
    %1228 = vmatprep.subr.mxu0 0.0
    %1229 = vmatpush2.msra.mxu0 0.0
    %1230 = vmatprep.mubr.f32.mxu0 0.0
    %1231 = vmatmul.mubr.f32.gmra.mxu0 %v1022
    %v1232 = vpop.f32.mrf.mxu0
    %v1233 = vadd.f32 %v1010, %v1232
    %v1234 = vpop.f32.mrf.mxu0
    %v1235 = vadd.f32 %v1014, %v1234
    %1236 = vdwg.mxu0
    %v1237 = vtanh.pop %v1091
    %v1238 = vtanh.pop %v1093
    %v1239 = vtanh.pop %v1162
    %v1240 = vtanh.pop %v1164
    %v1241 = vtanh.pop %v1233
    %v1242 = vtanh.pop %v1235
    %v1243 = vld [vmem:[%s7] sm:$0xff]
    %v1244 = vld [vmem:[%s7 + $0x8] sm:$0xff]
    %v1245 = vld [vmem:[%s7 + $0x10] sm:$0xff]
    %v1246 = vld [vmem:[%s7 + $0x18] sm:$0xff]
    %v1247 = vld [vmem:[%s7 + $0x20] sm:$0xff]
    %v1248 = vld [vmem:[%s7 + $0x28] sm:$0xff]
    %v1249 = vld [vmem:[%s7 + $0x30] sm:$0xff]
    %v1250 = vld [vmem:[%s7 + $0x38] sm:$0xff]
    %v1251 = vld [vmem:[%s8] sm:$0xff]
    %v1252 = vld [vmem:[%s8 + $0x8] sm:$0xff]
    %v1253 = vld [vmem:[%s8 + $0x10] sm:$0xff]
    %v1254 = vld [vmem:[%s8 + $0x18] sm:$0xff]
    %v1255 = vld [vmem:[%s8 + $0x20] sm:$0xff]
    %v1256 = vld [vmem:[%s8 + $0x28] sm:$0xff]
    %v1257 = vld [vmem:[%s8 + $0x30] sm:$0xff]
    %v1258 = vld [vmem:[%s8 + $0x38] sm:$0xff]
    %v1259 = vld [vmem:[%s8 + $0x40] sm:$0xff]
    %v1260 = vld [vmem:[%s8 + $0x48] sm:$0xff]
    %v1261 = vld [vmem:[%s8 + $0x50] sm:$0xff]
    %v1262 = vld [vmem:[%s8 + $0x58] sm:$0xff]
    %v1263 = vld [vmem:[%s8 + $0x60] sm:$0xff]
    %v1264 = vld [vmem:[%s8 + $0x68] sm:$0xff]
    %v1265 = vld [vmem:[%s8 + $0x70] sm:$0xff]
    %v1266 = vld [vmem:[%s8 + $0x78] sm:$0xff]
    %v1267 = vld [vmem:[%s8 + $0x80] sm:$0xff]
    %v1268 = vld [vmem:[%s8 + $0x88] sm:$0xff]
    %v1269 = vld [vmem:[%s8 + $0x90] sm:$0xff]
    %v1270 = vld [vmem:[%s8 + $0x98] sm:$0xff]
    %v1271 = vld [vmem:[%s8 + $0xa0] sm:$0xff]
    %v1272 = vld [vmem:[%s8 + $0xa8] sm:$0xff]
    %v1273 = vld [vmem:[%s8 + $0xb0] sm:$0xff]
    %v1274 = vld [vmem:[%s8 + $0xb8] sm:$0xff]
    %v1275 = vld [vmem:[%s8 + $0xc0] sm:$0xff]
    %v1276 = vld [vmem:[%s8 + $0xc8] sm:$0xff]
    %v1277 = vld [vmem:[%s8 + $0xd0] sm:$0xff]
    %v1278 = vld [vmem:[%s8 + $0xd8] sm:$0xff]
    %v1279 = vld [vmem:[%s8 + $0xe0] sm:$0xff]
    %v1280 = vld [vmem:[%s8 + $0xe8] sm:$0xff]
    %v1281 = vld [vmem:[%s8 + $0xf0] sm:$0xff]
    %v1282 = vld [vmem:[%s8 + $0xf8] sm:$0xff]
    %v1283 = vld [vmem:[%s8 + $0x100] sm:$0xff]
    %v1284 = vld [vmem:[%s8 + $0x108] sm:$0xff]
    %v1285 = vld [vmem:[%s8 + $0x110] sm:$0xff]
    %v1286 = vld [vmem:[%s8 + $0x118] sm:$0xff]
    %v1287 = vld [vmem:[%s8 + $0x120] sm:$0xff]
    %v1288 = vld [vmem:[%s8 + $0x128] sm:$0xff]
    %v1289 = vld [vmem:[%s8 + $0x130] sm:$0xff]
    %v1290 = vld [vmem:[%s8 + $0x138] sm:$0xff]
    %v1291 = vld [vmem:[%s8 + $0x140] sm:$0xff]
    %v1292 = vld [vmem:[%s8 + $0x148] sm:$0xff]
    %v1293 = vld [vmem:[%s8 + $0x150] sm:$0xff]
    %v1294 = vld [vmem:[%s8 + $0x158] sm:$0xff]
    %v1295 = vld [vmem:[%s8 + $0x160] sm:$0xff]
    %v1296 = vld [vmem:[%s8 + $0x168] sm:$0xff]
    %v1297 = vld [vmem:[%s8 + $0x170] sm:$0xff]
    %v1298 = vld [vmem:[%s8 + $0x178] sm:$0xff]
    %v1299 = vld [vmem:[%s8 + $0x180] sm:$0xff]
    %v1300 = vld [vmem:[%s8 + $0x188] sm:$0xff]
    %v1301 = vld [vmem:[%s8 + $0x190] sm:$0xff]
    %v1302 = vld [vmem:[%s8 + $0x198] sm:$0xff]
    %v1303 = vld [vmem:[%s8 + $0x1a0] sm:$0xff]
    %v1304 = vld [vmem:[%s8 + $0x1a8] sm:$0xff]
    %v1305 = vld [vmem:[%s8 + $0x1b0] sm:$0xff]
    %v1306 = vld [vmem:[%s8 + $0x1b8] sm:$0xff]
    %v1307 = vld [vmem:[%s8 + $0x1c0] sm:$0xff]
    %v1308 = vld [vmem:[%s8 + $0x1c8] sm:$0xff]
    %v1309 = vld [vmem:[%s8 + $0x1d0] sm:$0xff]
    %v1310 = vld [vmem:[%s8 + $0x1d8] sm:$0xff]
    %v1311 = vld [vmem:[%s8 + $0x1e0] sm:$0xff]
    %v1312 = vld [vmem:[%s8 + $0x1e8] sm:$0xff]
    %v1313 = vld [vmem:[%s8 + $0x1f0] sm:$0xff]
    %v1314 = vld [vmem:[%s8 + $0x1f8] sm:$0xff]
    %v1315 = vld [vmem:[%s8 + $0x200] sm:$0xff]
    %v1316 = vld [vmem:[%s8 + $0x208] sm:$0xff]
    %v1317 = vld [vmem:[%s8 + $0x210] sm:$0xff]
    %v1318 = vld [vmem:[%s8 + $0x218] sm:$0xff]
    %v1319 = vld [vmem:[%s8 + $0x220] sm:$0xff]
    %v1320 = vld [vmem:[%s8 + $0x228] sm:$0xff]
    %v1321 = vld [vmem:[%s8 + $0x230] sm:$0xff]
    %v1322 = vld [vmem:[%s8 + $0x238] sm:$0xff]
    %v1323 = vld [vmem:[%s8 + $0x240] sm:$0xff]
    %v1324 = vld [vmem:[%s8 + $0x248] sm:$0xff]
    %v1325 = vld [vmem:[%s8 + $0x250] sm:$0xff]
    %v1326 = vld [vmem:[%s8 + $0x258] sm:$0xff]
    %v1327 = vld [vmem:[%s8 + $0x260] sm:$0xff]
    %v1328 = vld [vmem:[%s8 + $0x268] sm:$0xff]
    %v1329 = vld [vmem:[%s8 + $0x270] sm:$0xff]
    %v1330 = vld [vmem:[%s8 + $0x278] sm:$0xff]
    %v1331 = vld [vmem:[%s8 + $0x280] sm:$0xff]
    %v1332 = vld [vmem:[%s8 + $0x288] sm:$0xff]
    %v1333 = vld [vmem:[%s8 + $0x290] sm:$0xff]
    %v1334 = vld [vmem:[%s8 + $0x298] sm:$0xff]
    %v1335 = vld [vmem:[%s8 + $0x2a0] sm:$0xff]
    %v1336 = vld [vmem:[%s8 + $0x2a8] sm:$0xff]
    %v1337 = vld [vmem:[%s8 + $0x2b0] sm:$0xff]
    %v1338 = vld [vmem:[%s8 + $0x2b8] sm:$0xff]
    %v1339 = vld [vmem:[%s8 + $0x2c0] sm:$0xff]
    %v1340 = vld [vmem:[%s8 + $0x2c8] sm:$0xff]
    %v1341 = vld [vmem:[%s8 + $0x2d0] sm:$0xff]
    %v1342 = vld [vmem:[%s8 + $0x2d8] sm:$0xff]
    %v1343 = vld [vmem:[%s8 + $0x2e0] sm:$0xff]
    %v1344 = vld [vmem:[%s8 + $0x2e8] sm:$0xff]
    %v1345 = vld [vmem:[%s8 + $0x2f0] sm:$0xff]
    %v1346 = vld [vmem:[%s8 + $0x2f8] sm:$0xff]
    %1347 = vmatprep.subr.mxu0 0.0
    %1348 = vmatpush1.msra.mxu0 %v1266
    %1349 = vmatprep.subr.mxu0 0.0
    %1350 = vmatpush1.msra.mxu0 %v1265
    %1351 = vmatprep.subr.mxu0 0.0
    %1352 = vmatpush1.msra.mxu0 %v1264
    %1353 = vmatprep.subr.mxu0 0.0
    %1354 = vmatpush1.msra.mxu0 %v1263
    %1355 = vmatprep.subr.mxu0 0.0
    %1356 = vmatpush1.msra.mxu0 %v1262
    %1357 = vmatprep.subr.mxu0 0.0
    %1358 = vmatpush1.msra.mxu0 %v1261
    %1359 = vmatprep.subr.mxu0 0.0
    %1360 = vmatpush1.msra.mxu0 %v1260
    %1361 = vmatprep.subr.mxu0 0.0
    %1362 = vmatpush1.msra.mxu0 %v1259
    %1363 = vmatprep.subr.mxu0 0.0
    %1364 = vmatpush1.msra.mxu0 %v1258
    %1365 = vmatprep.subr.mxu0 0.0
    %1366 = vmatpush1.msra.mxu0 %v1257
    %1367 = vmatprep.subr.mxu0 0.0
    %1368 = vmatpush1.msra.mxu0 %v1256
    %1369 = vmatprep.subr.mxu0 0.0
    %1370 = vmatpush1.msra.mxu0 %v1255
    %1371 = vmatprep.subr.mxu0 0.0
    %1372 = vmatpush1.msra.mxu0 %v1254
    %1373 = vmatprep.subr.mxu0 0.0
    %1374 = vmatpush1.msra.mxu0 %v1253
    %1375 = vmatprep.subr.mxu0 0.0
    %1376 = vmatpush1.msra.mxu0 %v1252
    %1377 = vmatprep.subr.mxu0 0.0
    %1378 = vmatpush1.msra.mxu0 %v1251
    %1379 = vmatprep.subr.mxu0 0.0
    %1380 = vmatpush2.msra.mxu0 %v1282
    %1381 = vmatprep.subr.mxu0 0.0
    %1382 = vmatpush2.msra.mxu0 %v1281
    %1383 = vmatprep.subr.mxu0 0.0
    %1384 = vmatpush2.msra.mxu0 %v1280
    %1385 = vmatprep.subr.mxu0 0.0
    %1386 = vmatpush2.msra.mxu0 %v1279
    %1387 = vmatprep.subr.mxu0 0.0
    %1388 = vmatpush2.msra.mxu0 %v1278
    %1389 = vmatprep.subr.mxu0 0.0
    %1390 = vmatpush2.msra.mxu0 %v1277
    %1391 = vmatprep.subr.mxu0 0.0
    %1392 = vmatpush2.msra.mxu0 %v1276
    %1393 = vmatprep.subr.mxu0 0.0
    %1394 = vmatpush2.msra.mxu0 %v1275
    %1395 = vmatprep.subr.mxu0 0.0
    %1396 = vmatpush2.msra.mxu0 %v1274
    %1397 = vmatprep.subr.mxu0 0.0
    %1398 = vmatpush2.msra.mxu0 %v1273
    %1399 = vmatprep.subr.mxu0 0.0
    %1400 = vmatpush2.msra.mxu0 %v1272
    %1401 = vmatprep.subr.mxu0 0.0
    %1402 = vmatpush2.msra.mxu0 %v1271
    %1403 = vmatprep.subr.mxu0 0.0
    %1404 = vmatpush2.msra.mxu0 %v1270
    %1405 = vmatprep.subr.mxu0 0.0
    %1406 = vmatpush2.msra.mxu0 %v1269
    %1407 = vmatprep.subr.mxu0 0.0
    %1408 = vmatpush2.msra.mxu0 %v1268
    %1409 = vmatprep.subr.mxu0 0.0
    %1410 = vmatpush2.msra.mxu0 %v1267
    %1411 = vmatprep.mubr.f32.mxu0 %v1238
    %1412 = vmatmul.mubr.f32.gmra.mxu0 %v1237
    %v1413 = vpop.f32.mrf.mxu0
    %v1414 = vadd.f32 0.0, %v1413
    %v1415 = vpop.f32.mrf.mxu0
    %1416 = vdwg.mxu0
    %1417 = vmatprep.subr.mxu0 0.0
    %1418 = vmatpush1.msra.mxu0 %v1298
    %1419 = vmatprep.subr.mxu0 0.0
    %1420 = vmatpush1.msra.mxu0 %v1297
    %1421 = vmatprep.subr.mxu0 0.0
    %1422 = vmatpush1.msra.mxu0 %v1296
    %1423 = vmatprep.subr.mxu0 0.0
    %1424 = vmatpush1.msra.mxu0 %v1295
    %1425 = vmatprep.subr.mxu0 0.0
    %1426 = vmatpush1.msra.mxu0 %v1294
    %1427 = vmatprep.subr.mxu0 0.0
    %1428 = vmatpush1.msra.mxu0 %v1293
    %1429 = vmatprep.subr.mxu0 0.0
    %1430 = vmatpush1.msra.mxu0 %v1292
    %1431 = vmatprep.subr.mxu0 0.0
    %1432 = vmatpush1.msra.mxu0 %v1291
    %1433 = vmatprep.subr.mxu0 0.0
    %1434 = vmatpush1.msra.mxu0 %v1290
    %1435 = vmatprep.subr.mxu0 0.0
    %1436 = vmatpush1.msra.mxu0 %v1289
    %1437 = vmatprep.subr.mxu0 0.0
    %1438 = vmatpush1.msra.mxu0 %v1288
    %1439 = vmatprep.subr.mxu0 0.0
    %1440 = vmatpush1.msra.mxu0 %v1287
    %1441 = vmatprep.subr.mxu0 0.0
    %1442 = vmatpush1.msra.mxu0 %v1286
    %1443 = vmatprep.subr.mxu0 0.0
    %1444 = vmatpush1.msra.mxu0 %v1285
    %1445 = vmatprep.subr.mxu0 0.0
    %1446 = vmatpush1.msra.mxu0 %v1284
    %1447 = vmatprep.subr.mxu0 0.0
    %1448 = vmatpush1.msra.mxu0 %v1283
    %1449 = vmatprep.subr.mxu0 0.0
    %1450 = vmatpush2.msra.mxu0 %v1314
    %1451 = vmatprep.subr.mxu0 0.0
    %1452 = vmatpush2.msra.mxu0 %v1313
    %1453 = vmatprep.subr.mxu0 0.0
    %1454 = vmatpush2.msra.mxu0 %v1312
    %1455 = vmatprep.subr.mxu0 0.0
    %1456 = vmatpush2.msra.mxu0 %v1311
    %1457 = vmatprep.subr.mxu0 0.0
    %1458 = vmatpush2.msra.mxu0 %v1310
    %1459 = vmatprep.subr.mxu0 0.0
    %1460 = vmatpush2.msra.mxu0 %v1309
    %1461 = vmatprep.subr.mxu0 0.0
    %1462 = vmatpush2.msra.mxu0 %v1308
    %1463 = vmatprep.subr.mxu0 0.0
    %1464 = vmatpush2.msra.mxu0 %v1307
    %1465 = vmatprep.subr.mxu0 0.0
    %1466 = vmatpush2.msra.mxu0 %v1306
    %1467 = vmatprep.subr.mxu0 0.0
    %1468 = vmatpush2.msra.mxu0 %v1305
    %1469 = vmatprep.subr.mxu0 0.0
    %1470 = vmatpush2.msra.mxu0 %v1304
    %1471 = vmatprep.subr.mxu0 0.0
    %1472 = vmatpush2.msra.mxu0 %v1303
    %1473 = vmatprep.subr.mxu0 0.0
    %1474 = vmatpush2.msra.mxu0 %v1302
    %1475 = vmatprep.subr.mxu0 0.0
    %1476 = vmatpush2.msra.mxu0 %v1301
    %1477 = vmatprep.subr.mxu0 0.0
    %1478 = vmatpush2.msra.mxu0 %v1300
    %1479 = vmatprep.subr.mxu0 0.0
    %1480 = vmatpush2.msra.mxu0 %v1299
    %1481 = vmatprep.mubr.f32.mxu0 %v1240
    %1482 = vmatmul.mubr.f32.gmra.mxu0 %v1239
    %v1483 = vpop.f32.mrf.mxu0
    %v1484 = vadd.f32 %v1414, %v1483
    %v1485 = vpop.f32.mrf.mxu0
    %1486 = vdwg.mxu0
    %1487 = vmatprep.subr.mxu0 0.0
    %1488 = vmatpush1.msra.mxu0 %v1330
    %1489 = vmatprep.subr.mxu0 0.0
    %1490 = vmatpush1.msra.mxu0 %v1329
    %1491 = vmatprep.subr.mxu0 0.0
    %1492 = vmatpush1.msra.mxu0 %v1328
    %1493 = vmatprep.subr.mxu0 0.0
    %1494 = vmatpush1.msra.mxu0 %v1327
    %1495 = vmatprep.subr.mxu0 0.0
    %1496 = vmatpush1.msra.mxu0 %v1326
    %1497 = vmatprep.subr.mxu0 0.0
    %1498 = vmatpush1.msra.mxu0 %v1325
    %1499 = vmatprep.subr.mxu0 0.0
    %1500 = vmatpush1.msra.mxu0 %v1324
    %1501 = vmatprep.subr.mxu0 0.0
    %1502 = vmatpush1.msra.mxu0 %v1323
    %1503 = vmatprep.subr.mxu0 0.0
    %1504 = vmatpush1.msra.mxu0 %v1322
    %1505 = vmatprep.subr.mxu0 0.0
    %1506 = vmatpush1.msra.mxu0 %v1321
    %1507 = vmatprep.subr.mxu0 0.0
    %1508 = vmatpush1.msra.mxu0 %v1320
    %1509 = vmatprep.subr.mxu0 0.0
    %1510 = vmatpush1.msra.mxu0 %v1319
    %1511 = vmatprep.subr.mxu0 0.0
    %1512 = vmatpush1.msra.mxu0 %v1318
    %1513 = vmatprep.subr.mxu0 0.0
    %1514 = vmatpush1.msra.mxu0 %v1317
    %1515 = vmatprep.subr.mxu0 0.0
    %1516 = vmatpush1.msra.mxu0 %v1316
    %1517 = vmatprep.subr.mxu0 0.0
    %1518 = vmatpush1.msra.mxu0 %v1315
    %1519 = vmatprep.subr.mxu0 0.0
    %1520 = vmatpush2.msra.mxu0 %v1346
    %1521 = vmatprep.subr.mxu0 0.0
    %1522 = vmatpush2.msra.mxu0 %v1345
    %1523 = vmatprep.subr.mxu0 0.0
    %1524 = vmatpush2.msra.mxu0 %v1344
    %1525 = vmatprep.subr.mxu0 0.0
    %1526 = vmatpush2.msra.mxu0 %v1343
    %1527 = vmatprep.subr.mxu0 0.0
    %1528 = vmatpush2.msra.mxu0 %v1342
    %1529 = vmatprep.subr.mxu0 0.0
    %1530 = vmatpush2.msra.mxu0 %v1341
    %1531 = vmatprep.subr.mxu0 0.0
    %1532 = vmatpush2.msra.mxu0 %v1340
    %1533 = vmatprep.subr.mxu0 0.0
    %1534 = vmatpush2.msra.mxu0 %v1339
    %1535 = vmatprep.subr.mxu0 0.0
    %1536 = vmatpush2.msra.mxu0 %v1338
    %1537 = vmatprep.subr.mxu0 0.0
    %1538 = vmatpush2.msra.mxu0 %v1337
    %1539 = vmatprep.subr.mxu0 0.0
    %1540 = vmatpush2.msra.mxu0 %v1336
    %1541 = vmatprep.subr.mxu0 0.0
    %1542 = vmatpush2.msra.mxu0 %v1335
    %1543 = vmatprep.subr.mxu0 0.0
    %1544 = vmatpush2.msra.mxu0 %v1334
    %1545 = vmatprep.subr.mxu0 0.0
    %1546 = vmatpush2.msra.mxu0 %v1333
    %1547 = vmatprep.subr.mxu0 0.0
    %1548 = vmatpush2.msra.mxu0 %v1332
    %1549 = vmatprep.subr.mxu0 0.0
    %1550 = vmatpush2.msra.mxu0 %v1331
    %1551 = vmatprep.mubr.f32.mxu0 %v1242
    %1552 = vmatmul.mubr.f32.gmra.mxu0 %v1241
    %v1553 = vpop.f32.mrf.mxu0
    %v1554 = vadd.f32 %v1484, %v1553
    %v1555 = vpop.f32.mrf.mxu0
    %1556 = vdwg.mxu0
    %v1558 = vsel %vm758, %v901, 0
    %1560 = vmatprep.subr.mxu0 0.0
    %1561 = vmatpush1.msra.mxu0 0.0
    %1562 = vmatprep.subr.mxu0 0.0
    %1563 = vmatpush1.msra.mxu0 0.0
    %1564 = vmatprep.subr.mxu0 0.0
    %1565 = vmatpush1.msra.mxu0 0.0
    %1566 = vmatprep.subr.mxu0 0.0
    %1567 = vmatpush1.msra.mxu0 0.0
    %1568 = vmatprep.subr.mxu0 0.0
    %1569 = vmatpush1.msra.mxu0 0.0
    %1570 = vmatprep.subr.mxu0 0.0
    %1571 = vmatpush1.msra.mxu0 0.0
    %1572 = vmatprep.subr.mxu0 0.0
    %1573 = vmatpush1.msra.mxu0 0.0
    %1574 = vmatprep.subr.mxu0 0.0
    %1575 = vmatpush1.msra.mxu0 0.0
    %1576 = vmatprep.subr.mxu0 0.0
    %1577 = vmatpush1.msra.mxu0 %v1250
    %1578 = vmatprep.subr.mxu0 0.0
    %1579 = vmatpush1.msra.mxu0 %v1249
    %1580 = vmatprep.subr.mxu0 0.0
    %1581 = vmatpush1.msra.mxu0 %v1248
    %1582 = vmatprep.subr.mxu0 0.0
    %1583 = vmatpush1.msra.mxu0 %v1247
    %1584 = vmatprep.subr.mxu0 0.0
    %1585 = vmatpush1.msra.mxu0 %v1246
    %1586 = vmatprep.subr.mxu0 0.0
    %1587 = vmatpush1.msra.mxu0 %v1245
    %1588 = vmatprep.subr.mxu0 0.0
    %1589 = vmatpush1.msra.mxu0 %v1244
    %1590 = vmatprep.subr.mxu0 0.0
    %1591 = vmatpush1.msra.mxu0 %v1243
    %1592 = vmatprep.subr.mxu0 0.0
    %1593 = vmatpush2.msra.mxu0 0.0
    %1594 = vmatprep.subr.mxu0 0.0
    %1595 = vmatpush2.msra.mxu0 0.0
    %1596 = vmatprep.subr.mxu0 0.0
    %1597 = vmatpush2.msra.mxu0 0.0
    %1598 = vmatprep.subr.mxu0 0.0
    %1599 = vmatpush2.msra.mxu0 0.0
    %1600 = vmatprep.subr.mxu0 0.0
    %1601 = vmatpush2.msra.mxu0 0.0
    %1602 = vmatprep.subr.mxu0 0.0
    %1603 = vmatpush2.msra.mxu0 0.0
    %1604 = vmatprep.subr.mxu0 0.0
    %1605 = vmatpush2.msra.mxu0 0.0
    %1606 = vmatprep.subr.mxu0 0.0
    %1607 = vmatpush2.msra.mxu0 0.0
    %1608 = vmatprep.subr.mxu0 0.0
    %1609 = vmatpush2.msra.mxu0 0.0
    %1610 = vmatprep.subr.mxu0 0.0
    %1611 = vmatpush2.msra.mxu0 0.0
    %1612 = vmatprep.subr.mxu0 0.0
    %1613 = vmatpush2.msra.mxu0 0.0
    %1614 = vmatprep.subr.mxu0 0.0
    %1615 = vmatpush2.msra.mxu0 0.0
    %1616 = vmatprep.subr.mxu0 0.0
    %1617 = vmatpush2.msra.mxu0 0.0
    %1618 = vmatprep.subr.mxu0 0.0
    %1619 = vmatpush2.msra.mxu0 0.0
    %1620 = vmatprep.subr.mxu0 0.0
    %1621 = vmatpush2.msra.mxu0 0.0
    %1622 = vmatprep.subr.mxu0 0.0
    %1623 = vmatpush2.msra.mxu0 0.0
    %1624 = vmatprep.mubr.f32.mxu0 0.0
    %1625 = vmatmul.mubr.f32.gmra.mxu0 %v1558
    %v1626 = vpop.f32.mrf.mxu0
    %v1627 = vadd.f32 %v1554, %v1626
    %v1628 = vpop.f32.mrf.mxu0
    %1629 = vdwg.mxu0
    %v1630 = vld [vmem:[%s9] sm:$0x1]
    %v1632 = vlaneseq
    %v1633 = vshrl.u32 %v1632, 7
    %v1634 = vsub.s32 0, %v1633
    %v1635 = vrot.slane %v1630, %v1634
    %v1637 = vadd.f32 %v1627, %v1635
    %v1638 = vsub.f32 0.0, %v1637
    %v1639 = vmul.f32 %v1638, 1.442695
    %v1640 = vpow.pop %v1639
    %v1641 = vadd.f32 %v1640, 1.0
    %v1642 = vrcp.pop %v1641
    %v1643 = vmul.f32 1.0, %v1642
    %1644 = vst [vmem:[#allocation2] sm:$0x3] %v1643
    // Predicated region
    $region42: #{multilabel_cnn_forward.1} parent=1 // pred_check
      _
    $region43: #{multilabel_cnn_forward.1} parent=1 // pred_check_branch
      %1646 = sbr.rel (0) target = $region45
    $region44: #{multilabel_cnn_forward.1} parent=1 // pred_region
      %s1648 = ssub.s32 32, 32
      %1649 = vsyncadd [#allocation3], %s1648
      %s1651 = sshll.u32 [#allocation2], 4
      %s1652 = int_to_ptr.vmem [resolvable:$true] %s1651
      %1654 = dma.vmem_to_hbm [thread:$0]  %s1652, 32, %s10, [#allocation3]
    $region45: #{multilabel_cnn_forward.1} parent=1 // pred_fallthru
      _
    // Predicated region
    $region46: #{multilabel_cnn_forward.1} parent=1 // pred_check
      _
    $region47: #{multilabel_cnn_forward.1} parent=1 // pred_check_branch
      %1656 = sbr.rel (0) target = $region49
    $region48: #{multilabel_cnn_forward.1} parent=1 // pred_region
      %1657 = dma.done [#allocation3], 32
    $region49: #{multilabel_cnn_forward.1} parent=1 // pred_fallthru
      _
    %1658 = vsyncpa [#allocation3], 1

</llo_original>
